<compile_context>
chip_gen: v5e
topology: v5e:2x2
jax: 0.10.0
libtpu: 0.0.40
codegen_flags: <defaults>
</compile_context>

<pallas_src>
import functools

import jax
import jax.numpy as jnp
from jax.experimental import pallas as pl
from jax.experimental.pallas import tpu as pltpu


# ----------------------------------------------------------------------------
# Fused forward kernel (single grid step, everything resident in VMEM)
# ----------------------------------------------------------------------------
def _cpw_fused_kernel(n_deconv, alpha, eps, cp_cols, *refs):
    """refs = [z, W1, b1, g1, be1, W2, b2,
               (M_l, bvec_l, P_l, gamma_l, beta_l) * n_deconv,
               Hmat, hbias, out]   — all full-array VMEM blocks."""
    z_ref, w1_ref, b1_ref, g1_ref, be1_ref, w2_ref, b2_ref = refs[:7]
    rest = refs[7:]
    layer_refs = [rest[l * 5:(l + 1) * 5] for l in range(n_deconv)]
    hmat_ref, hbias_ref, out_ref = rest[n_deconv * 5:]

    f32 = jnp.float32
    z = z_ref[...]
    inv_b = 1.0 / z.shape[0]

    def leaky_relu(y):
        return jnp.maximum(y, alpha * y)

    # ---- dense MLP: Linear -> BatchNorm1d (batch stats) -> LeakyReLU -> Linear ----
    h = jnp.dot(z, w1_ref[...], preferred_element_type=f32) + b1_ref[...]
    mean = jnp.sum(h, axis=0, keepdims=True) * inv_b
    ex2 = jnp.sum(h * h, axis=0, keepdims=True) * inv_b
    var = jnp.maximum(ex2 - mean * mean, 0.0)
    h = (h - mean) * jax.lax.rsqrt(var + eps) * g1_ref[...] + be1_ref[...]
    h = leaky_relu(h)
    # x: (B, C0*W0) flat NCW layout (col = c*W0 + m) == torch .view(-1, C0, W0)
    x = jnp.dot(h, w2_ref[...], preferred_element_type=f32) + b2_ref[...]

    # ---- deconv stack: ConvTranspose1d(4,2,1) as dense matmul -> BN -> LeakyReLU ----
    for m_ref, bvec_ref, p_ref, gamma_ref, beta_ref in layer_refs:
        pre = jnp.dot(x, m_ref[...], preferred_element_type=f32) + bvec_ref[...]
        # Single-pass batch statistics per output channel over (batch, width):
        # P averages the lanes of each channel group; inv_b averages the rows.
        stats = jnp.concatenate(
            [jnp.sum(pre, axis=0, keepdims=True),
             jnp.sum(pre * pre, axis=0, keepdims=True)], axis=0)          # (2, C*W)
        stats = jnp.dot(stats, p_ref[...], preferred_element_type=f32) * inv_b
        mean = stats[0:1, :]
        var = jnp.maximum(stats[1:2, :] - mean * mean, 0.0)
        x = leaky_relu((pre - mean) * jax.lax.rsqrt(var + eps) * gamma_ref[...]
                       + beta_ref[...])

    # ---- fused heads: [Conv1d(C,2,1)+Tanh | Conv1d(C,1,1)+Sigmoid] in one matmul ----
    pre = jnp.dot(x, hmat_ref[...], preferred_element_type=f32) + hbias_ref[...]
    col = jax.lax.broadcasted_iota(jnp.int32, pre.shape, 1)
    out_ref[...] = jnp.where(col < cp_cols, jnp.tanh(pre), jax.nn.sigmoid(pre))


# ----------------------------------------------------------------------------
# One-time parameter preparation (layout plumbing lives here, not in the kernel)
# ----------------------------------------------------------------------------
def _convtranspose_as_matrix(w_t, win):
    """Exact dense matrix of ConvTranspose1d(k=4, s=2, p=1) on NCW-flat vectors.

    w_t: (Cin, Cout, 4) torch weight layout.
    Input col = cin*Win + m, output col = cout*Wout + o, with o = 2m + t - 1."""
    cin, cout, k = w_t.shape
    wout = 2 * win
    m_idx = jnp.arange(win)
    o_idx = jnp.arange(wout)
    mat = jnp.zeros((cin * win, cout * wout), jnp.float32)
    for t in range(k):
        sel = ((2 * m_idx + t - 1)[:, None] == o_idx[None, :]).astype(jnp.float32)
        mat = mat + jnp.kron(w_t[:, :, t], sel)
    return mat


def prepare_params(params):
    """Pre-cast / pre-reshape all parameters into the flat input list the fused
    kernel expects.  Done once; the hot path only runs the single pallas_call."""
    f32 = jnp.float32

    def row(v):
        return jnp.asarray(v, f32).reshape(1, -1)

    inputs = [
        jnp.asarray(params["w1"], f32), row(params["b1"]),
        row(params["bn1_g"]), row(params["bn1_b"]),
        jnp.asarray(params["w2"], f32), row(params["b2"]),
    ]

    win = params["in_width"]
    for (w_t, b_t, gamma, beta) in params["deconv"]:
        _cin, cout, _k = w_t.shape
        wout = 2 * win
        m_mat = _convtranspose_as_matrix(jnp.asarray(w_t, f32), win)
        bvec = row(jnp.repeat(jnp.asarray(b_t, f32), wout))
        # Channel-group averaging matrix (lane reduction + broadcast in one matmul).
        grp = jnp.repeat(jnp.eye(cout, dtype=f32), wout, axis=0)        # (C*W, C)
        p_mat = (grp @ grp.T) / float(wout)                             # (C*W, C*W)
        gamma_b = row(jnp.repeat(jnp.asarray(gamma, f32), wout))
        beta_b = row(jnp.repeat(jnp.asarray(beta, f32), wout))
        inputs += [m_mat, bvec, p_mat, gamma_b, beta_b]
        win = wout

    n_cp = win
    whead = jnp.concatenate(
        [jnp.asarray(params["wcp"], f32), jnp.asarray(params["ww"], f32)], axis=0)  # (3, C)
    hmat = jnp.kron(whead.T, jnp.eye(n_cp, dtype=f32))                  # (C*n_cp, 3*n_cp)
    hbias = row(jnp.repeat(
        jnp.concatenate([jnp.asarray(params["bcp"], f32), jnp.asarray(params["bw"], f32)]),
        n_cp))
    inputs += [hmat, hbias]

    return {"inputs": tuple(inputs), "n_deconv": len(params["deconv"]), "n_cp": int(n_cp)}


# ----------------------------------------------------------------------------
# Forward
# ----------------------------------------------------------------------------
@functools.partial(jax.jit, static_argnums=(2, 3))
def _cpw_forward_jit(z, flat_inputs, n_deconv, n_cp):
    z = z.astype(jnp.float32)
    bsz = z.shape[0]
    out_cols = 3 * n_cp
    all_in = (z,) + tuple(flat_inputs)

    kernel = functools.partial(_cpw_fused_kernel, n_deconv, 0.2, 1e-5, 2 * n_cp)
    out = pl.pallas_call(
        kernel,
        out_shape=jax.ShapeDtypeStruct((bsz, out_cols), jnp.float32),
        grid=(1,),
        in_specs=[pl.BlockSpec(a.shape, lambda i: (0, 0)) for a in all_in],
        out_specs=pl.BlockSpec((bsz, out_cols), lambda i: (0, 0)),
        compiler_params=pltpu.CompilerParams(dimension_semantics=("arbitrary",)),
    )(*all_in)

    # Output columns are [cp_x | cp_y | w], each n_cp wide -> PyTorch NCW layout
    # with pure wrapper reshapes (no data-movement kernels).
    cp = out[:, : 2 * n_cp].reshape(bsz, 2, n_cp)
    w = out[:, 2 * n_cp:].reshape(bsz, 1, n_cp)
    return cp, w


def cpw_generator_forward(z, prepped):
    return _cpw_forward_jit(z, prepped["inputs"], prepped["n_deconv"], prepped["n_cp"])


# ----------------------------------------------------------------------------
# Deterministic parameter initialization (shapes per CPWGenerator.__init__)
# ----------------------------------------------------------------------------
def init_params(key, in_features, n_control_points, dense_layers, deconv_channels):
    n_l = len(deconv_channels) - 1
    in_chnl = deconv_channels[0]
    in_width = n_control_points // (2 ** n_l)
    assert in_width >= 4, "Too many deconvolutional layers."
    dense_out = in_chnl * in_width
    hidden = dense_layers[0]

    keys = iter(jax.random.split(key, 32))

    def nrm(shape, scale=0.1):
        return scale * jax.random.normal(next(keys), shape, dtype=jnp.float32)

    params = {
        "in_chnl": in_chnl,
        "in_width": in_width,
        # MLP (Linear weights stored as (in, out))
        "w1": nrm((in_features, hidden)), "b1": nrm((hidden,)),
        "bn1_g": jnp.ones((hidden,), jnp.float32), "bn1_b": jnp.zeros((hidden,), jnp.float32),
        "w2": nrm((hidden, dense_out)), "b2": nrm((dense_out,)),
        # heads (torch Conv1d 1x1 weight layout (out_ch, in_ch))
        "wcp": nrm((2, deconv_channels[-1])), "bcp": nrm((2,)),
        "ww": nrm((1, deconv_channels[-1])), "bw": nrm((1,)),
        "deconv": [],
    }
    for cin, cout in zip(deconv_channels[:-1], deconv_channels[1:]):
        params["deconv"].append((
            nrm((cin, cout, 4)),                       # torch ConvTranspose1d weight
            nrm((cout,)),                              # conv bias
            jnp.ones((cout,), jnp.float32),            # BN gamma
            jnp.zeros((cout,), jnp.float32),           # BN beta
        ))
    return params


# ----------------------------------------------------------------------------
# Pure-JAX reference (mirrors the PyTorch module op-by-op) for self-check
# ----------------------------------------------------------------------------
def _reference_forward(z, params, alpha=0.2, eps=1e-5):
    def bn(x, gamma, beta, axes):
        mean = jnp.mean(x, axis=axes, keepdims=True)
        var = jnp.mean(jnp.square(x - mean), axis=axes, keepdims=True)
        return (x - mean) * jax.lax.rsqrt(var + eps) * gamma + beta

    def lrelu(x):
        return jnp.where(x >= 0, x, alpha * x)

    h = z @ params["w1"] + params["b1"]
    h = lrelu(bn(h, params["bn1_g"], params["bn1_b"], axes=(0,)))
    x = h @ params["w2"] + params["b2"]
    bsz = z.shape[0]
    x = x.reshape(bsz, params["in_chnl"], params["in_width"])          # NCW

    for (w_t, b_t, gamma, beta) in params["deconv"]:
        _cin, cout, k = w_t.shape
        win = x.shape[2]
        wout = 2 * win
        out = jnp.zeros((bsz, cout, wout), jnp.float32)
        for t in range(k):
            for m in range(win):
                o = 2 * m + t - 1
                if 0 <= o < wout:
                    out = out.at[:, :, o].add(
                        jnp.einsum("bi,io->bo", x[:, :, m], w_t[:, :, t]))
        out = out + b_t[None, :, None]
        x = lrelu(bn(out, gamma[None, :, None], beta[None, :, None], axes=(0, 2)))

    cp = jnp.tanh(jnp.einsum("bcw,jc->bjw", x, params["wcp"]) + params["bcp"][None, :, None])
    w = jax.nn.sigmoid(jnp.einsum("bcw,jc->bjw", x, params["ww"]) + params["bw"][None, :, None])
    return cp, w


if __name__ == "__main__":
    # Small shapes consistent with the module:
    #   in_features=8, n_control_points=32, dense_layers=(32,),
    #   deconv_channels=(64, 32, 16, 8) -> in_chnl=64, in_width=4
    batch = 2
    in_features = 8
    n_control_points = 32
    dense_layers = (32,)
    deconv_channels = (64, 32, 16, 8)

    key = jax.random.PRNGKey(0)
    k_param, k_z = jax.random.split(key)
    params = init_params(k_param, in_features, n_control_points,
                         dense_layers, deconv_channels)
    z = jax.random.normal(k_z, (batch, in_features), dtype=jnp.float32)

    prepped = prepare_params(params)
    cp, w = cpw_generator_forward(z, prepped)
    cp, w = jax.block_until_ready(cp), jax.block_until_ready(w)

    assert cp.shape == (batch, 2, n_control_points), cp.shape
    assert w.shape == (batch, 1, n_control_points), w.shape
    assert bool(jnp.all(jnp.isfinite(cp))) and bool(jnp.all(jnp.isfinite(w)))
    assert bool(jnp.all(jnp.abs(cp) <= 1.0)) and bool(jnp.all((w >= 0) & (w <= 1)))

    # Numerical check against a pure-JAX reference of the PyTorch forward.
    cp_ref, w_ref = _reference_forward(z, params)
    assert jnp.allclose(cp, cp_ref, rtol=1e-3, atol=1e-3), \
        float(jnp.max(jnp.abs(cp - cp_ref)))
    assert jnp.allclose(w, w_ref, rtol=1e-3, atol=1e-3), \
        float(jnp.max(jnp.abs(w - w_ref)))

    print("KERNEL_OK")
</pallas_src>

<mosaic_0001>
module attributes {stable_mosaic.version = 11 : i64} {
  func.func @_cpw_fused_kernel(%arg0: i32, %arg1: memref<2x8xf32, #tpu.memory_space<vmem>>, %arg2: memref<8x32xf32, #tpu.memory_space<vmem>>, %arg3: memref<1x32xf32, #tpu.memory_space<vmem>>, %arg4: memref<1x32xf32, #tpu.memory_space<vmem>>, %arg5: memref<1x32xf32, #tpu.memory_space<vmem>>, %arg6: memref<32x256xf32, #tpu.memory_space<vmem>>, %arg7: memref<1x256xf32, #tpu.memory_space<vmem>>, %arg8: memref<256x256xf32, #tpu.memory_space<vmem>>, %arg9: memref<1x256xf32, #tpu.memory_space<vmem>>, %arg10: memref<256x256xf32, #tpu.memory_space<vmem>>, %arg11: memref<1x256xf32, #tpu.memory_space<vmem>>, %arg12: memref<1x256xf32, #tpu.memory_space<vmem>>, %arg13: memref<256x256xf32, #tpu.memory_space<vmem>>, %arg14: memref<1x256xf32, #tpu.memory_space<vmem>>, %arg15: memref<256x256xf32, #tpu.memory_space<vmem>>, %arg16: memref<1x256xf32, #tpu.memory_space<vmem>>, %arg17: memref<1x256xf32, #tpu.memory_space<vmem>>, %arg18: memref<256x256xf32, #tpu.memory_space<vmem>>, %arg19: memref<1x256xf32, #tpu.memory_space<vmem>>, %arg20: memref<256x256xf32, #tpu.memory_space<vmem>>, %arg21: memref<1x256xf32, #tpu.memory_space<vmem>>, %arg22: memref<1x256xf32, #tpu.memory_space<vmem>>, %arg23: memref<256x96xf32, #tpu.memory_space<vmem>>, %arg24: memref<1x96xf32, #tpu.memory_space<vmem>>, %arg25: memref<2x96xf32, #tpu.memory_space<vmem>>) attributes {dimension_semantics = [#tpu.dimension_semantics<arbitrary>], iteration_bounds = array<i64: 1>, scalar_prefetch = 0 : i64, scratch_operands = 0 : i64, tpu.core_type = #tpu.core_type<tc>, window_params = [{pipeline_mode = #tpu.pipeline_mode<synchronous>, transform_indices = @transform_0, window_bounds = array<i64: 2, 8>}, {pipeline_mode = #tpu.pipeline_mode<synchronous>, transform_indices = @transform_1, window_bounds = array<i64: 8, 32>}, {pipeline_mode = #tpu.pipeline_mode<synchronous>, transform_indices = @transform_2, window_bounds = array<i64: 1, 32>}, {pipeline_mode = #tpu.pipeline_mode<synchronous>, transform_indices = @transform_3, window_bounds = array<i64: 1, 32>}, {pipeline_mode = #tpu.pipeline_mode<synchronous>, transform_indices = @transform_4, window_bounds = array<i64: 1, 32>}, {pipeline_mode = #tpu.pipeline_mode<synchronous>, transform_indices = @transform_5, window_bounds = array<i64: 32, 256>}, {pipeline_mode = #tpu.pipeline_mode<synchronous>, transform_indices = @transform_6, window_bounds = array<i64: 1, 256>}, {pipeline_mode = #tpu.pipeline_mode<synchronous>, transform_indices = @transform_7, window_bounds = array<i64: 256, 256>}, {pipeline_mode = #tpu.pipeline_mode<synchronous>, transform_indices = @transform_8, window_bounds = array<i64: 1, 256>}, {pipeline_mode = #tpu.pipeline_mode<synchronous>, transform_indices = @transform_9, window_bounds = array<i64: 256, 256>}, {pipeline_mode = #tpu.pipeline_mode<synchronous>, transform_indices = @transform_10, window_bounds = array<i64: 1, 256>}, {pipeline_mode = #tpu.pipeline_mode<synchronous>, transform_indices = @transform_11, window_bounds = array<i64: 1, 256>}, {pipeline_mode = #tpu.pipeline_mode<synchronous>, transform_indices = @transform_12, window_bounds = array<i64: 256, 256>}, {pipeline_mode = #tpu.pipeline_mode<synchronous>, transform_indices = @transform_13, window_bounds = array<i64: 1, 256>}, {pipeline_mode = #tpu.pipeline_mode<synchronous>, transform_indices = @transform_14, window_bounds = array<i64: 256, 256>}, {pipeline_mode = #tpu.pipeline_mode<synchronous>, transform_indices = @transform_15, window_bounds = array<i64: 1, 256>}, {pipeline_mode = #tpu.pipeline_mode<synchronous>, transform_indices = @transform_16, window_bounds = array<i64: 1, 256>}, {pipeline_mode = #tpu.pipeline_mode<synchronous>, transform_indices = @transform_17, window_bounds = array<i64: 256, 256>}, {pipeline_mode = #tpu.pipeline_mode<synchronous>, transform_indices = @transform_18, window_bounds = array<i64: 1, 256>}, {pipeline_mode = #tpu.pipeline_mode<synchronous>, transform_indices = @transform_19, window_bounds = array<i64: 256, 256>}, {pipeline_mode = #tpu.pipeline_mode<synchronous>, transform_indices = @transform_20, window_bounds = array<i64: 1, 256>}, {pipeline_mode = #tpu.pipeline_mode<synchronous>, transform_indices = @transform_21, window_bounds = array<i64: 1, 256>}, {pipeline_mode = #tpu.pipeline_mode<synchronous>, transform_indices = @transform_22, window_bounds = array<i64: 256, 96>}, {pipeline_mode = #tpu.pipeline_mode<synchronous>, transform_indices = @transform_23, window_bounds = array<i64: 1, 96>}, {pipeline_mode = #tpu.pipeline_mode<synchronous>, transform_indices = @transform_24, window_bounds = array<i64: 2, 96>}]} {
    %c0 = arith.constant 0 : index
    %c0_0 = arith.constant 0 : index
    %0 = vector.load %arg1[%c0, %c0_0] : memref<2x8xf32, #tpu.memory_space<vmem>>, vector<2x8xf32>
    %c0_1 = arith.constant 0 : index
    %c0_2 = arith.constant 0 : index
    %1 = vector.load %arg2[%c0_1, %c0_2] : memref<8x32xf32, #tpu.memory_space<vmem>>, vector<8x32xf32>
    %cst = arith.constant dense<0.000000e+00> : vector<2x32xf32>
    %2 = tpu.matmul %0, %1, %cst {dimension_numbers = #tpu.dot_dimension_numbers<[1], [0], [0], [1], [0, 0, 1, 1], [], []>} : vector<2x8xf32>, vector<8x32xf32>, vector<2x32xf32> -> vector<2x32xf32>
    %c0_3 = arith.constant 0 : index
    %c0_4 = arith.constant 0 : index
    %3 = vector.load %arg3[%c0_3, %c0_4] : memref<1x32xf32, #tpu.memory_space<vmem>>, vector<1x32xf32>
    %4 = vector.broadcast %3 : vector<1x32xf32> to vector<2x32xf32>
    %5 = arith.addf %2, %4 : vector<2x32xf32>
    %cst_5 = arith.constant dense<0.000000e+00> : vector<32xf32>
    %6 = vector.multi_reduction <add>, %5, %cst_5 [0] : vector<2x32xf32> to vector<32xf32>
    %7 = vector.shape_cast %6 : vector<32xf32> to vector<1x32xf32>
    %cst_6 = arith.constant 5.000000e-01 : f32
    %8 = vector.broadcast %cst_6 : f32 to vector<1x32xf32>
    %9 = arith.mulf %7, %8 : vector<1x32xf32>
    %10 = arith.mulf %5, %5 : vector<2x32xf32>
    %cst_7 = arith.constant dense<0.000000e+00> : vector<32xf32>
    %11 = vector.multi_reduction <add>, %10, %cst_7 [0] : vector<2x32xf32> to vector<32xf32>
    %12 = vector.shape_cast %11 : vector<32xf32> to vector<1x32xf32>
    %cst_8 = arith.constant 5.000000e-01 : f32
    %13 = vector.broadcast %cst_8 : f32 to vector<1x32xf32>
    %14 = arith.mulf %12, %13 : vector<1x32xf32>
    %15 = arith.mulf %9, %9 : vector<1x32xf32>
    %16 = arith.subf %14, %15 : vector<1x32xf32>
    %cst_9 = arith.constant 0.000000e+00 : f32
    %17 = vector.broadcast %cst_9 : f32 to vector<1x32xf32>
    %18 = arith.maximumf %16, %17 : vector<1x32xf32>
    %19 = vector.broadcast %9 : vector<1x32xf32> to vector<2x32xf32>
    %20 = arith.subf %5, %19 : vector<2x32xf32>
    %cst_10 = arith.constant 9.99999974E-6 : f32
    %21 = vector.broadcast %cst_10 : f32 to vector<1x32xf32>
    %22 = arith.addf %18, %21 : vector<1x32xf32>
    %23 = math.rsqrt %22 : vector<1x32xf32>
    %24 = vector.broadcast %23 : vector<1x32xf32> to vector<2x32xf32>
    %25 = arith.mulf %20, %24 : vector<2x32xf32>
    %c0_11 = arith.constant 0 : index
    %c0_12 = arith.constant 0 : index
    %26 = vector.load %arg4[%c0_11, %c0_12] : memref<1x32xf32, #tpu.memory_space<vmem>>, vector<1x32xf32>
    %27 = vector.broadcast %26 : vector<1x32xf32> to vector<2x32xf32>
    %28 = arith.mulf %25, %27 : vector<2x32xf32>
    %c0_13 = arith.constant 0 : index
    %c0_14 = arith.constant 0 : index
    %29 = vector.load %arg5[%c0_13, %c0_14] : memref<1x32xf32, #tpu.memory_space<vmem>>, vector<1x32xf32>
    %30 = vector.broadcast %29 : vector<1x32xf32> to vector<2x32xf32>
    %31 = arith.addf %28, %30 : vector<2x32xf32>
    %cst_15 = arith.constant 2.000000e-01 : f32
    %32 = vector.broadcast %cst_15 : f32 to vector<2x32xf32>
    %33 = arith.mulf %32, %31 : vector<2x32xf32>
    %34 = arith.maximumf %31, %33 : vector<2x32xf32>
    %c0_16 = arith.constant 0 : index
    %c0_17 = arith.constant 0 : index
    %35 = vector.load %arg6[%c0_16, %c0_17] : memref<32x256xf32, #tpu.memory_space<vmem>>, vector<32x256xf32>
    %cst_18 = arith.constant dense<0.000000e+00> : vector<2x256xf32>
    %36 = tpu.matmul %34, %35, %cst_18 {dimension_numbers = #tpu.dot_dimension_numbers<[1], [0], [0], [1], [0, 0, 1, 1], [], []>} : vector<2x32xf32>, vector<32x256xf32>, vector<2x256xf32> -> vector<2x256xf32>
    %c0_19 = arith.constant 0 : index
    %c0_20 = arith.constant 0 : index
    %37 = vector.load %arg7[%c0_19, %c0_20] : memref<1x256xf32, #tpu.memory_space<vmem>>, vector<1x256xf32>
    %38 = vector.broadcast %37 : vector<1x256xf32> to vector<2x256xf32>
    %39 = arith.addf %36, %38 : vector<2x256xf32>
    %c0_21 = arith.constant 0 : index
    %c0_22 = arith.constant 0 : index
    %40 = vector.load %arg8[%c0_21, %c0_22] : memref<256x256xf32, #tpu.memory_space<vmem>>, vector<256x256xf32>
    %cst_23 = arith.constant dense<0.000000e+00> : vector<2x256xf32>
    %41 = tpu.matmul %39, %40, %cst_23 {dimension_numbers = #tpu.dot_dimension_numbers<[1], [0], [0], [1], [0, 0, 1, 1], [], []>} : vector<2x256xf32>, vector<256x256xf32>, vector<2x256xf32> -> vector<2x256xf32>
    %c0_24 = arith.constant 0 : index
    %c0_25 = arith.constant 0 : index
    %42 = vector.load %arg9[%c0_24, %c0_25] : memref<1x256xf32, #tpu.memory_space<vmem>>, vector<1x256xf32>
    %43 = vector.broadcast %42 : vector<1x256xf32> to vector<2x256xf32>
    %44 = arith.addf %41, %43 : vector<2x256xf32>
    %cst_26 = arith.constant dense<0.000000e+00> : vector<256xf32>
    %45 = vector.multi_reduction <add>, %44, %cst_26 [0] : vector<2x256xf32> to vector<256xf32>
    %46 = vector.shape_cast %45 : vector<256xf32> to vector<1x256xf32>
    %47 = arith.mulf %44, %44 : vector<2x256xf32>
    %cst_27 = arith.constant dense<0.000000e+00> : vector<256xf32>
    %48 = vector.multi_reduction <add>, %47, %cst_27 [0] : vector<2x256xf32> to vector<256xf32>
    %49 = vector.shape_cast %48 : vector<256xf32> to vector<1x256xf32>
    %50 = tpu.concatenate %46, %49 in 0 : vector<1x256xf32>, vector<1x256xf32> -> vector<2x256xf32>
    %c0_28 = arith.constant 0 : index
    %c0_29 = arith.constant 0 : index
    %51 = vector.load %arg10[%c0_28, %c0_29] : memref<256x256xf32, #tpu.memory_space<vmem>>, vector<256x256xf32>
    %cst_30 = arith.constant dense<0.000000e+00> : vector<2x256xf32>
    %52 = tpu.matmul %50, %51, %cst_30 {dimension_numbers = #tpu.dot_dimension_numbers<[1], [0], [0], [1], [0, 0, 1, 1], [], []>} : vector<2x256xf32>, vector<256x256xf32>, vector<2x256xf32> -> vector<2x256xf32>
    %cst_31 = arith.constant 5.000000e-01 : f32
    %53 = vector.broadcast %cst_31 : f32 to vector<2x256xf32>
    %54 = arith.mulf %52, %53 : vector<2x256xf32>
    %55 = vector.extract_strided_slice %54 {offsets = [0, 0], sizes = [1, 256], strides = [1, 1]} : vector<2x256xf32> to vector<1x256xf32>
    %56 = vector.extract_strided_slice %54 {offsets = [1, 0], sizes = [1, 256], strides = [1, 1]} : vector<2x256xf32> to vector<1x256xf32>
    %57 = arith.mulf %55, %55 : vector<1x256xf32>
    %58 = arith.subf %56, %57 : vector<1x256xf32>
    %cst_32 = arith.constant 0.000000e+00 : f32
    %59 = vector.broadcast %cst_32 : f32 to vector<1x256xf32>
    %60 = arith.maximumf %58, %59 : vector<1x256xf32>
    %61 = vector.broadcast %55 : vector<1x256xf32> to vector<2x256xf32>
    %62 = arith.subf %44, %61 : vector<2x256xf32>
    %cst_33 = arith.constant 9.99999974E-6 : f32
    %63 = vector.broadcast %cst_33 : f32 to vector<1x256xf32>
    %64 = arith.addf %60, %63 : vector<1x256xf32>
    %65 = math.rsqrt %64 : vector<1x256xf32>
    %66 = vector.broadcast %65 : vector<1x256xf32> to vector<2x256xf32>
    %67 = arith.mulf %62, %66 : vector<2x256xf32>
    %c0_34 = arith.constant 0 : index
    %c0_35 = arith.constant 0 : index
    %68 = vector.load %arg11[%c0_34, %c0_35] : memref<1x256xf32, #tpu.memory_space<vmem>>, vector<1x256xf32>
    %69 = vector.broadcast %68 : vector<1x256xf32> to vector<2x256xf32>
    %70 = arith.mulf %67, %69 : vector<2x256xf32>
    %c0_36 = arith.constant 0 : index
    %c0_37 = arith.constant 0 : index
    %71 = vector.load %arg12[%c0_36, %c0_37] : memref<1x256xf32, #tpu.memory_space<vmem>>, vector<1x256xf32>
    %72 = vector.broadcast %71 : vector<1x256xf32> to vector<2x256xf32>
    %73 = arith.addf %70, %72 : vector<2x256xf32>
    %cst_38 = arith.constant 2.000000e-01 : f32
    %74 = vector.broadcast %cst_38 : f32 to vector<2x256xf32>
    %75 = arith.mulf %74, %73 : vector<2x256xf32>
    %76 = arith.maximumf %73, %75 : vector<2x256xf32>
    %c0_39 = arith.constant 0 : index
    %c0_40 = arith.constant 0 : index
    %77 = vector.load %arg13[%c0_39, %c0_40] : memref<256x256xf32, #tpu.memory_space<vmem>>, vector<256x256xf32>
    %cst_41 = arith.constant dense<0.000000e+00> : vector<2x256xf32>
    %78 = tpu.matmul %76, %77, %cst_41 {dimension_numbers = #tpu.dot_dimension_numbers<[1], [0], [0], [1], [0, 0, 1, 1], [], []>} : vector<2x256xf32>, vector<256x256xf32>, vector<2x256xf32> -> vector<2x256xf32>
    %c0_42 = arith.constant 0 : index
    %c0_43 = arith.constant 0 : index
    %79 = vector.load %arg14[%c0_42, %c0_43] : memref<1x256xf32, #tpu.memory_space<vmem>>, vector<1x256xf32>
    %80 = vector.broadcast %79 : vector<1x256xf32> to vector<2x256xf32>
    %81 = arith.addf %78, %80 : vector<2x256xf32>
    %cst_44 = arith.constant dense<0.000000e+00> : vector<256xf32>
    %82 = vector.multi_reduction <add>, %81, %cst_44 [0] : vector<2x256xf32> to vector<256xf32>
    %83 = vector.shape_cast %82 : vector<256xf32> to vector<1x256xf32>
    %84 = arith.mulf %81, %81 : vector<2x256xf32>
    %cst_45 = arith.constant dense<0.000000e+00> : vector<256xf32>
    %85 = vector.multi_reduction <add>, %84, %cst_45 [0] : vector<2x256xf32> to vector<256xf32>
    %86 = vector.shape_cast %85 : vector<256xf32> to vector<1x256xf32>
    %87 = tpu.concatenate %83, %86 in 0 : vector<1x256xf32>, vector<1x256xf32> -> vector<2x256xf32>
    %c0_46 = arith.constant 0 : index
    %c0_47 = arith.constant 0 : index
    %88 = vector.load %arg15[%c0_46, %c0_47] : memref<256x256xf32, #tpu.memory_space<vmem>>, vector<256x256xf32>
    %cst_48 = arith.constant dense<0.000000e+00> : vector<2x256xf32>
    %89 = tpu.matmul %87, %88, %cst_48 {dimension_numbers = #tpu.dot_dimension_numbers<[1], [0], [0], [1], [0, 0, 1, 1], [], []>} : vector<2x256xf32>, vector<256x256xf32>, vector<2x256xf32> -> vector<2x256xf32>
    %cst_49 = arith.constant 5.000000e-01 : f32
    %90 = vector.broadcast %cst_49 : f32 to vector<2x256xf32>
    %91 = arith.mulf %89, %90 : vector<2x256xf32>
    %92 = vector.extract_strided_slice %91 {offsets = [0, 0], sizes = [1, 256], strides = [1, 1]} : vector<2x256xf32> to vector<1x256xf32>
    %93 = vector.extract_strided_slice %91 {offsets = [1, 0], sizes = [1, 256], strides = [1, 1]} : vector<2x256xf32> to vector<1x256xf32>
    %94 = arith.mulf %92, %92 : vector<1x256xf32>
    %95 = arith.subf %93, %94 : vector<1x256xf32>
    %cst_50 = arith.constant 0.000000e+00 : f32
    %96 = vector.broadcast %cst_50 : f32 to vector<1x256xf32>
    %97 = arith.maximumf %95, %96 : vector<1x256xf32>
    %98 = vector.broadcast %92 : vector<1x256xf32> to vector<2x256xf32>
    %99 = arith.subf %81, %98 : vector<2x256xf32>
    %cst_51 = arith.constant 9.99999974E-6 : f32
    %100 = vector.broadcast %cst_51 : f32 to vector<1x256xf32>
    %101 = arith.addf %97, %100 : vector<1x256xf32>
    %102 = math.rsqrt %101 : vector<1x256xf32>
    %103 = vector.broadcast %102 : vector<1x256xf32> to vector<2x256xf32>
    %104 = arith.mulf %99, %103 : vector<2x256xf32>
    %c0_52 = arith.constant 0 : index
    %c0_53 = arith.constant 0 : index
    %105 = vector.load %arg16[%c0_52, %c0_53] : memref<1x256xf32, #tpu.memory_space<vmem>>, vector<1x256xf32>
    %106 = vector.broadcast %105 : vector<1x256xf32> to vector<2x256xf32>
    %107 = arith.mulf %104, %106 : vector<2x256xf32>
    %c0_54 = arith.constant 0 : index
    %c0_55 = arith.constant 0 : index
    %108 = vector.load %arg17[%c0_54, %c0_55] : memref<1x256xf32, #tpu.memory_space<vmem>>, vector<1x256xf32>
    %109 = vector.broadcast %108 : vector<1x256xf32> to vector<2x256xf32>
    %110 = arith.addf %107, %109 : vector<2x256xf32>
    %cst_56 = arith.constant 2.000000e-01 : f32
    %111 = vector.broadcast %cst_56 : f32 to vector<2x256xf32>
    %112 = arith.mulf %111, %110 : vector<2x256xf32>
    %113 = arith.maximumf %110, %112 : vector<2x256xf32>
    %c0_57 = arith.constant 0 : index
    %c0_58 = arith.constant 0 : index
    %114 = vector.load %arg18[%c0_57, %c0_58] : memref<256x256xf32, #tpu.memory_space<vmem>>, vector<256x256xf32>
    %cst_59 = arith.constant dense<0.000000e+00> : vector<2x256xf32>
    %115 = tpu.matmul %113, %114, %cst_59 {dimension_numbers = #tpu.dot_dimension_numbers<[1], [0], [0], [1], [0, 0, 1, 1], [], []>} : vector<2x256xf32>, vector<256x256xf32>, vector<2x256xf32> -> vector<2x256xf32>
    %c0_60 = arith.constant 0 : index
    %c0_61 = arith.constant 0 : index
    %116 = vector.load %arg19[%c0_60, %c0_61] : memref<1x256xf32, #tpu.memory_space<vmem>>, vector<1x256xf32>
    %117 = vector.broadcast %116 : vector<1x256xf32> to vector<2x256xf32>
    %118 = arith.addf %115, %117 : vector<2x256xf32>
    %cst_62 = arith.constant dense<0.000000e+00> : vector<256xf32>
    %119 = vector.multi_reduction <add>, %118, %cst_62 [0] : vector<2x256xf32> to vector<256xf32>
    %120 = vector.shape_cast %119 : vector<256xf32> to vector<1x256xf32>
    %121 = arith.mulf %118, %118 : vector<2x256xf32>
    %cst_63 = arith.constant dense<0.000000e+00> : vector<256xf32>
    %122 = vector.multi_reduction <add>, %121, %cst_63 [0] : vector<2x256xf32> to vector<256xf32>
    %123 = vector.shape_cast %122 : vector<256xf32> to vector<1x256xf32>
    %124 = tpu.concatenate %120, %123 in 0 : vector<1x256xf32>, vector<1x256xf32> -> vector<2x256xf32>
    %c0_64 = arith.constant 0 : index
    %c0_65 = arith.constant 0 : index
    %125 = vector.load %arg20[%c0_64, %c0_65] : memref<256x256xf32, #tpu.memory_space<vmem>>, vector<256x256xf32>
    %cst_66 = arith.constant dense<0.000000e+00> : vector<2x256xf32>
    %126 = tpu.matmul %124, %125, %cst_66 {dimension_numbers = #tpu.dot_dimension_numbers<[1], [0], [0], [1], [0, 0, 1, 1], [], []>} : vector<2x256xf32>, vector<256x256xf32>, vector<2x256xf32> -> vector<2x256xf32>
    %cst_67 = arith.constant 5.000000e-01 : f32
    %127 = vector.broadcast %cst_67 : f32 to vector<2x256xf32>
    %128 = arith.mulf %126, %127 : vector<2x256xf32>
    %129 = vector.extract_strided_slice %128 {offsets = [0, 0], sizes = [1, 256], strides = [1, 1]} : vector<2x256xf32> to vector<1x256xf32>
    %130 = vector.extract_strided_slice %128 {offsets = [1, 0], sizes = [1, 256], strides = [1, 1]} : vector<2x256xf32> to vector<1x256xf32>
    %131 = arith.mulf %129, %129 : vector<1x256xf32>
    %132 = arith.subf %130, %131 : vector<1x256xf32>
    %cst_68 = arith.constant 0.000000e+00 : f32
    %133 = vector.broadcast %cst_68 : f32 to vector<1x256xf32>
    %134 = arith.maximumf %132, %133 : vector<1x256xf32>
    %135 = vector.broadcast %129 : vector<1x256xf32> to vector<2x256xf32>
    %136 = arith.subf %118, %135 : vector<2x256xf32>
    %cst_69 = arith.constant 9.99999974E-6 : f32
    %137 = vector.broadcast %cst_69 : f32 to vector<1x256xf32>
    %138 = arith.addf %134, %137 : vector<1x256xf32>
    %139 = math.rsqrt %138 : vector<1x256xf32>
    %140 = vector.broadcast %139 : vector<1x256xf32> to vector<2x256xf32>
    %141 = arith.mulf %136, %140 : vector<2x256xf32>
    %c0_70 = arith.constant 0 : index
    %c0_71 = arith.constant 0 : index
    %142 = vector.load %arg21[%c0_70, %c0_71] : memref<1x256xf32, #tpu.memory_space<vmem>>, vector<1x256xf32>
    %143 = vector.broadcast %142 : vector<1x256xf32> to vector<2x256xf32>
    %144 = arith.mulf %141, %143 : vector<2x256xf32>
    %c0_72 = arith.constant 0 : index
    %c0_73 = arith.constant 0 : index
    %145 = vector.load %arg22[%c0_72, %c0_73] : memref<1x256xf32, #tpu.memory_space<vmem>>, vector<1x256xf32>
    %146 = vector.broadcast %145 : vector<1x256xf32> to vector<2x256xf32>
    %147 = arith.addf %144, %146 : vector<2x256xf32>
    %cst_74 = arith.constant 2.000000e-01 : f32
    %148 = vector.broadcast %cst_74 : f32 to vector<2x256xf32>
    %149 = arith.mulf %148, %147 : vector<2x256xf32>
    %150 = arith.maximumf %147, %149 : vector<2x256xf32>
    %c0_75 = arith.constant 0 : index
    %c0_76 = arith.constant 0 : index
    %151 = vector.load %arg23[%c0_75, %c0_76] : memref<256x96xf32, #tpu.memory_space<vmem>>, vector<256x96xf32>
    %cst_77 = arith.constant dense<0.000000e+00> : vector<2x96xf32>
    %152 = tpu.matmul %150, %151, %cst_77 {dimension_numbers = #tpu.dot_dimension_numbers<[1], [0], [0], [1], [0, 0, 1, 1], [], []>} : vector<2x256xf32>, vector<256x96xf32>, vector<2x96xf32> -> vector<2x96xf32>
    %c0_78 = arith.constant 0 : index
    %c0_79 = arith.constant 0 : index
    %153 = vector.load %arg24[%c0_78, %c0_79] : memref<1x96xf32, #tpu.memory_space<vmem>>, vector<1x96xf32>
    %154 = vector.broadcast %153 : vector<1x96xf32> to vector<2x96xf32>
    %155 = arith.addf %152, %154 : vector<2x96xf32>
    %156 = tpu.iota {dimensions = array<i32: 1>} : vector<2x96xi32>
    %c64_i32 = arith.constant 64 : i32
    %157 = vector.broadcast %c64_i32 : i32 to vector<2x96xi32>
    %158 = arith.cmpi slt, %156, %157 : vector<2x96xi32>
    %159 = math.tanh %155 : vector<2x96xf32>
    %160 = arith.negf %155 : vector<2x96xf32>
    %161 = math.exp %160 : vector<2x96xf32>
    %cst_80 = arith.constant 1.000000e+00 : f32
    %162 = vector.broadcast %cst_80 : f32 to vector<2x96xf32>
    %163 = arith.addf %162, %161 : vector<2x96xf32>
    %164 = arith.divf %162, %163 : vector<2x96xf32>
    %165 = arith.select %158, %159, %164 : vector<2x96xi1>, vector<2x96xf32>
    %c0_81 = arith.constant 0 : index
    %c0_82 = arith.constant 0 : index
    %166 = vector.load %arg25[%c0_81, %c0_82] : memref<2x96xf32, #tpu.memory_space<vmem>>, vector<2x96xf32>
    tpu.vector_store %arg25[%c0_81, %c0_82], %165 {strides = array<i32>} : memref<2x96xf32, #tpu.memory_space<vmem>>, vector<2x96xf32>,
    return
  }
  func.func @transform_0(%arg0: i32) -> (i32, i32) {
    %c0_i32 = arith.constant 0 : i32
    %c0_i32_0 = arith.constant 0 : i32
    %c0_i32_1 = arith.constant 0 : i32
    return %c0_i32, %c0_i32_0 : i32, i32
  }
  func.func @transform_1(%arg0: i32) -> (i32, i32) {
    %c0_i32 = arith.constant 0 : i32
    %c0_i32_0 = arith.constant 0 : i32
    %c0_i32_1 = arith.constant 0 : i32
    return %c0_i32, %c0_i32_0 : i32, i32
  }
  func.func @transform_2(%arg0: i32) -> (i32, i32) {
    %c0_i32 = arith.constant 0 : i32
    %c0_i32_0 = arith.constant 0 : i32
    %c0_i32_1 = arith.constant 0 : i32
    return %c0_i32, %c0_i32_0 : i32, i32
  }
  func.func @transform_3(%arg0: i32) -> (i32, i32) {
    %c0_i32 = arith.constant 0 : i32
    %c0_i32_0 = arith.constant 0 : i32
    %c0_i32_1 = arith.constant 0 : i32
    return %c0_i32, %c0_i32_0 : i32, i32
  }
  func.func @transform_4(%arg0: i32) -> (i32, i32) {
    %c0_i32 = arith.constant 0 : i32
    %c0_i32_0 = arith.constant 0 : i32
    %c0_i32_1 = arith.constant 0 : i32
    return %c0_i32, %c0_i32_0 : i32, i32
  }
  func.func @transform_5(%arg0: i32) -> (i32, i32) {
    %c0_i32 = arith.constant 0 : i32
    %c0_i32_0 = arith.constant 0 : i32
    %c0_i32_1 = arith.constant 0 : i32
    return %c0_i32, %c0_i32_0 : i32, i32
  }
  func.func @transform_6(%arg0: i32) -> (i32, i32) {
    %c0_i32 = arith.constant 0 : i32
    %c0_i32_0 = arith.constant 0 : i32
    %c0_i32_1 = arith.constant 0 : i32
    return %c0_i32, %c0_i32_0 : i32, i32
  }
  func.func @transform_7(%arg0: i32) -> (i32, i32) {
    %c0_i32 = arith.constant 0 : i32
    %c0_i32_0 = arith.constant 0 : i32
    %c0_i32_1 = arith.constant 0 : i32
    return %c0_i32, %c0_i32_0 : i32, i32
  }
  func.func @transform_8(%arg0: i32) -> (i32, i32) {
    %c0_i32 = arith.constant 0 : i32
    %c0_i32_0 = arith.constant 0 : i32
    %c0_i32_1 = arith.constant 0 : i32
    return %c0_i32, %c0_i32_0 : i32, i32
  }
  func.func @transform_9(%arg0: i32) -> (i32, i32) {
    %c0_i32 = arith.constant 0 : i32
    %c0_i32_0 = arith.constant 0 : i32
    %c0_i32_1 = arith.constant 0 : i32
    return %c0_i32, %c0_i32_0 : i32, i32
  }
  func.func @transform_10(%arg0: i32) -> (i32, i32) {
    %c0_i32 = arith.constant 0 : i32
    %c0_i32_0 = arith.constant 0 : i32
    %c0_i32_1 = arith.constant 0 : i32
    return %c0_i32, %c0_i32_0 : i32, i32
  }
  func.func @transform_11(%arg0: i32) -> (i32, i32) {
    %c0_i32 = arith.constant 0 : i32
    %c0_i32_0 = arith.constant 0 : i32
    %c0_i32_1 = arith.constant 0 : i32
    return %c0_i32, %c0_i32_0 : i32, i32
  }
  func.func @transform_12(%arg0: i32) -> (i32, i32) {
    %c0_i32 = arith.constant 0 : i32
    %c0_i32_0 = arith.constant 0 : i32
    %c0_i32_1 = arith.constant 0 : i32
    return %c0_i32, %c0_i32_0 : i32, i32
  }
  func.func @transform_13(%arg0: i32) -> (i32, i32) {
    %c0_i32 = arith.constant 0 : i32
    %c0_i32_0 = arith.constant 0 : i32
    %c0_i32_1 = arith.constant 0 : i32
    return %c0_i32, %c0_i32_0 : i32, i32
  }
  func.func @transform_14(%arg0: i32) -> (i32, i32) {
    %c0_i32 = arith.constant 0 : i32
    %c0_i32_0 = arith.constant 0 : i32
    %c0_i32_1 = arith.constant 0 : i32
    return %c0_i32, %c0_i32_0 : i32, i32
  }
  func.func @transform_15(%arg0: i32) -> (i32, i32) {
    %c0_i32 = arith.constant 0 : i32
    %c0_i32_0 = arith.constant 0 : i32
    %c0_i32_1 = arith.constant 0 : i32
    return %c0_i32, %c0_i32_0 : i32, i32
  }
  func.func @transform_16(%arg0: i32) -> (i32, i32) {
    %c0_i32 = arith.constant 0 : i32
    %c0_i32_0 = arith.constant 0 : i32
    %c0_i32_1 = arith.constant 0 : i32
    return %c0_i32, %c0_i32_0 : i32, i32
  }
  func.func @transform_17(%arg0: i32) -> (i32, i32) {
    %c0_i32 = arith.constant 0 : i32
    %c0_i32_0 = arith.constant 0 : i32
    %c0_i32_1 = arith.constant 0 : i32
    return %c0_i32, %c0_i32_0 : i32, i32
  }
  func.func @transform_18(%arg0: i32) -> (i32, i32) {
    %c0_i32 = arith.constant 0 : i32
    %c0_i32_0 = arith.constant 0 : i32
    %c0_i32_1 = arith.constant 0 : i32
    return %c0_i32, %c0_i32_0 : i32, i32
  }
  func.func @transform_19(%arg0: i32) -> (i32, i32) {
    %c0_i32 = arith.constant 0 : i32
    %c0_i32_0 = arith.constant 0 : i32
    %c0_i32_1 = arith.constant 0 : i32
    return %c0_i32, %c0_i32_0 : i32, i32
  }
  func.func @transform_20(%arg0: i32) -> (i32, i32) {
    %c0_i32 = arith.constant 0 : i32
    %c0_i32_0 = arith.constant 0 : i32
    %c0_i32_1 = arith.constant 0 : i32
    return %c0_i32, %c0_i32_0 : i32, i32
  }
  func.func @transform_21(%arg0: i32) -> (i32, i32) {
    %c0_i32 = arith.constant 0 : i32
    %c0_i32_0 = arith.constant 0 : i32
    %c0_i32_1 = arith.constant 0 : i32
    return %c0_i32, %c0_i32_0 : i32, i32
  }
  func.func @transform_22(%arg0: i32) -> (i32, i32) {
    %c0_i32 = arith.constant 0 : i32
    %c0_i32_0 = arith.constant 0 : i32
    %c0_i32_1 = arith.constant 0 : i32
    return %c0_i32, %c0_i32_0 : i32, i32
  }
  func.func @transform_23(%arg0: i32) -> (i32, i32) {
    %c0_i32 = arith.constant 0 : i32
    %c0_i32_0 = arith.constant 0 : i32
    %c0_i32_1 = arith.constant 0 : i32
    return %c0_i32, %c0_i32_0 : i32, i32
  }
  func.func @transform_24(%arg0: i32) -> (i32, i32) {
    %c0_i32 = arith.constant 0 : i32
    %c0_i32_0 = arith.constant 0 : i32
    %c0_i32_1 = arith.constant 0 : i32
    return %c0_i32, %c0_i32_0 : i32, i32
  }
}

</mosaic_0001>

<llo_original>
// kernel: _cpw_forward_jit.1
$region0: #{_cpw_forward_jit.1}
  #allocation0 [shape = 'u32[]', space=smem, size = 0x4, offset = 0x4, fixed_abs, tag = 'smem constant byte address 0x4 - core index']
  #allocation1 [shape = 'u32[72,128]{1,0:T(1,128)}', space=vmem, size = 0x9000, scoped, tag = 'internal scratch']
  %s0 = inlined_call_operand.vmem [shape: f32[2,8], index: 0, kind: input, shape index: {}]
  %s1 = inlined_call_operand.vmem [shape: f32[8,32], index: 1, kind: input, shape index: {}]
  %s2 = inlined_call_operand.vmem [shape: f32[1,32], index: 2, kind: input, shape index: {}]
  %s3 = inlined_call_operand.vmem [shape: f32[1,32], index: 3, kind: input, shape index: {}]
  %s4 = inlined_call_operand.vmem [shape: f32[1,32], index: 4, kind: input, shape index: {}]
  %s5 = inlined_call_operand.vmem [shape: f32[32,256], index: 5, kind: input, shape index: {}]
  %s6 = inlined_call_operand.vmem [shape: f32[1,256], index: 6, kind: input, shape index: {}]
  %s7 = inlined_call_operand.hbm [shape: f32[256,256], index: 7, kind: input, shape index: {}]
  %s8 = inlined_call_operand.vmem [shape: f32[1,256], index: 8, kind: input, shape index: {}]
  %s9 = inlined_call_operand.hbm [shape: f32[256,256], index: 9, kind: input, shape index: {}]
  %s10 = inlined_call_operand.vmem [shape: f32[1,256], index: 10, kind: input, shape index: {}]
  %s11 = inlined_call_operand.vmem [shape: f32[1,256], index: 11, kind: input, shape index: {}]
  %s12 = inlined_call_operand.hbm [shape: f32[256,256], index: 12, kind: input, shape index: {}]
  %s13 = inlined_call_operand.vmem [shape: f32[1,256], index: 13, kind: input, shape index: {}]
  %s14 = inlined_call_operand.hbm [shape: f32[256,256], index: 14, kind: input, shape index: {}]
  %s15 = inlined_call_operand.vmem [shape: f32[1,256], index: 15, kind: input, shape index: {}]
  %s16 = inlined_call_operand.vmem [shape: f32[1,256], index: 16, kind: input, shape index: {}]
  %s17 = inlined_call_operand.hbm [shape: f32[256,256], index: 17, kind: input, shape index: {}]
  %s18 = inlined_call_operand.vmem [shape: f32[1,256], index: 18, kind: input, shape index: {}]
  %s19 = inlined_call_operand.hbm [shape: f32[256,256], index: 19, kind: input, shape index: {}]
  %s20 = inlined_call_operand.vmem [shape: f32[1,256], index: 20, kind: input, shape index: {}]
  %s21 = inlined_call_operand.vmem [shape: f32[1,256], index: 21, kind: input, shape index: {}]
  %s22 = inlined_call_operand.vmem [shape: f32[256,96], index: 22, kind: input, shape index: {}]
  %s23 = inlined_call_operand.vmem [shape: f32[1,96], index: 23, kind: input, shape index: {}]
  %s24 = inlined_call_operand.vmem [shape: f32[2,96], index: 24, kind: output, shape index: {}]
  %s25 = sld [smem:[#allocation0]]
  $region130: #{_cpw_forward_jit.1} parent=0
    _
  %s27 = ssub.s32 1, %s25
  %s28 = scalar_select 0, %s27, %s25
  $region1: #{_cpw_forward_jit.1} parent=0
    #allocation2 [shape = 'u8[262144]{0}', space=vmem, size = 0x40000, scoped, tag = 'input window, operand 7, single buffered']
    #allocation3 [shape = 's32[1]{0}', space=sflag, size = 0x4, scoped, tag = 'scoped memory for _cpw_forward_jit.1']
    #allocation4 [shape = 'u8[262144]{0}', space=vmem, size = 0x40000, scoped, tag = 'input window, operand 9, single buffered']
    #allocation5 [shape = 's32[1]{0}', space=sflag, size = 0x4, scoped, tag = 'scoped memory for _cpw_forward_jit.1']
    #allocation6 [shape = 'u8[262144]{0}', space=vmem, size = 0x40000, scoped, tag = 'input window, operand 12, single buffered']
    #allocation7 [shape = 'u8[262144]{0}', space=vmem, size = 0x40000, scoped, tag = 'input window, operand 14, single buffered']
    #allocation8 [shape = 's32[1]{0}', space=sflag, size = 0x4, scoped, tag = 'scoped memory for _cpw_forward_jit.1']
    #allocation9 [shape = 'u8[262144]{0}', space=vmem, size = 0x40000, scoped, tag = 'input window, operand 17, single buffered']
    #allocation10 [shape = 'u8[262144]{0}', space=vmem, size = 0x40000, scoped, tag = 'input window, operand 19, single buffered']
    #allocation11 [shape = 's32[1]{0}', space=sflag, size = 0x4, scoped, tag = 'scoped memory for _cpw_forward_jit.1']
    %29 = vsyncpa [#allocation3], 0
    %30 = vsyncpa [#allocation5], 0
    %31 = vsyncpa [#allocation8], 0
    %32 = vsyncpa [#allocation11], 0
    // Predicated region
    $region2: #{_cpw_forward_jit.1} parent=1 // pred_check
      _
    $region3: #{_cpw_forward_jit.1} parent=1 // pred_check_branch
      %34 = sbr.rel (0) target = $region5
    $region4: #{_cpw_forward_jit.1} parent=1 // pred_region
      _
    $region5: #{_cpw_forward_jit.1} parent=1 // pred_fallthru
      _
    // Predicated region
    $region6: #{_cpw_forward_jit.1} parent=1 // pred_check
      _
    $region7: #{_cpw_forward_jit.1} parent=1 // pred_check_branch
      %36 = sbr.rel (0) target = $region9
    $region8: #{_cpw_forward_jit.1} parent=1 // pred_region
      _
    $region9: #{_cpw_forward_jit.1} parent=1 // pred_fallthru
      _
    // Predicated region
    $region10: #{_cpw_forward_jit.1} parent=1 // pred_check
      _
    $region11: #{_cpw_forward_jit.1} parent=1 // pred_check_branch
      %38 = sbr.rel (0) target = $region13
    $region12: #{_cpw_forward_jit.1} parent=1 // pred_region
      _
    $region13: #{_cpw_forward_jit.1} parent=1 // pred_fallthru
      _
    // Predicated region
    $region14: #{_cpw_forward_jit.1} parent=1 // pred_check
      _
    $region15: #{_cpw_forward_jit.1} parent=1 // pred_check_branch
      %40 = sbr.rel (0) target = $region17
    $region16: #{_cpw_forward_jit.1} parent=1 // pred_region
      _
    $region17: #{_cpw_forward_jit.1} parent=1 // pred_fallthru
      _
    // Predicated region
    $region18: #{_cpw_forward_jit.1} parent=1 // pred_check
      _
    $region19: #{_cpw_forward_jit.1} parent=1 // pred_check_branch
      %42 = sbr.rel (0) target = $region21
    $region20: #{_cpw_forward_jit.1} parent=1 // pred_region
      _
    $region21: #{_cpw_forward_jit.1} parent=1 // pred_fallthru
      _
    // Predicated region
    $region22: #{_cpw_forward_jit.1} parent=1 // pred_check
      _
    $region23: #{_cpw_forward_jit.1} parent=1 // pred_check_branch
      %44 = sbr.rel (0) target = $region25
    $region24: #{_cpw_forward_jit.1} parent=1 // pred_region
      _
    $region25: #{_cpw_forward_jit.1} parent=1 // pred_fallthru
      _
    // Predicated region
    $region26: #{_cpw_forward_jit.1} parent=1 // pred_check
      _
    $region27: #{_cpw_forward_jit.1} parent=1 // pred_check_branch
      %46 = sbr.rel (0) target = $region29
    $region28: #{_cpw_forward_jit.1} parent=1 // pred_region
      _
    $region29: #{_cpw_forward_jit.1} parent=1 // pred_fallthru
      _
    // Predicated region
    $region30: #{_cpw_forward_jit.1} parent=1 // pred_check
      _
    $region31: #{_cpw_forward_jit.1} parent=1 // pred_check_branch
      %48 = sbr.rel (0) target = $region33
    $region32: #{_cpw_forward_jit.1} parent=1 // pred_region
      %50 = vsyncadd [#allocation3], 0
      %s51 = sshll.u32 %s7, 4
      %s52 = int_to_ptr.hbm [resolvable:$true] %s51
      %s53 = sshll.u32 [#allocation2], 4
      %s54 = int_to_ptr.vmem [resolvable:$true] %s53
      %59 = dma.hbm_to_vmem [thread:$0]  %s52, 8192, %s54, [#allocation3], 256, 256, 16
    $region33: #{_cpw_forward_jit.1} parent=1 // pred_fallthru
      _
    // Predicated region
    $region34: #{_cpw_forward_jit.1} parent=1 // pred_check
      _
    $region35: #{_cpw_forward_jit.1} parent=1 // pred_check_branch
      %61 = sbr.rel (0) target = $region37
    $region36: #{_cpw_forward_jit.1} parent=1 // pred_region
      _
    $region37: #{_cpw_forward_jit.1} parent=1 // pred_fallthru
      _
    // Predicated region
    $region38: #{_cpw_forward_jit.1} parent=1 // pred_check
      _
    $region39: #{_cpw_forward_jit.1} parent=1 // pred_check_branch
      %63 = sbr.rel (0) target = $region41
    $region40: #{_cpw_forward_jit.1} parent=1 // pred_region
      %65 = vsyncadd [#allocation5], 0
      %s66 = sshll.u32 %s9, 4
      %s67 = int_to_ptr.hbm [resolvable:$true] %s66
      %s68 = sshll.u32 [#allocation4], 4
      %s69 = int_to_ptr.vmem [resolvable:$true] %s68
      %74 = dma.hbm_to_vmem [thread:$0]  %s67, 8192, %s69, [#allocation5], 256, 256, 16
    $region41: #{_cpw_forward_jit.1} parent=1 // pred_fallthru
      _
    // Predicated region
    $region42: #{_cpw_forward_jit.1} parent=1 // pred_check
      _
    $region43: #{_cpw_forward_jit.1} parent=1 // pred_check_branch
      %76 = sbr.rel (0) target = $region45
    $region44: #{_cpw_forward_jit.1} parent=1 // pred_region
      _
    $region45: #{_cpw_forward_jit.1} parent=1 // pred_fallthru
      _
    // Predicated region
    $region46: #{_cpw_forward_jit.1} parent=1 // pred_check
      _
    $region47: #{_cpw_forward_jit.1} parent=1 // pred_check_branch
      %78 = sbr.rel (0) target = $region49
    $region48: #{_cpw_forward_jit.1} parent=1 // pred_region
      _
    $region49: #{_cpw_forward_jit.1} parent=1 // pred_fallthru
      _
    // Predicated region
    $region50: #{_cpw_forward_jit.1} parent=1 // pred_check
      _
    $region51: #{_cpw_forward_jit.1} parent=1 // pred_check_branch
      %80 = sbr.rel (0) target = $region53
    $region52: #{_cpw_forward_jit.1} parent=1 // pred_region
      %82 = vsyncadd [#allocation5], 0
      %s83 = sshll.u32 %s12, 4
      %s84 = int_to_ptr.hbm [resolvable:$true] %s83
      %s85 = sshll.u32 [#allocation6], 4
      %s86 = int_to_ptr.vmem [resolvable:$true] %s85
      %91 = dma.hbm_to_vmem [thread:$0]  %s84, 8192, %s86, [#allocation5], 256, 256, 16
    $region53: #{_cpw_forward_jit.1} parent=1 // pred_fallthru
      _
    // Predicated region
    $region54: #{_cpw_forward_jit.1} parent=1 // pred_check
      _
    $region55: #{_cpw_forward_jit.1} parent=1 // pred_check_branch
      %93 = sbr.rel (0) target = $region57
    $region56: #{_cpw_forward_jit.1} parent=1 // pred_region
      _
    $region57: #{_cpw_forward_jit.1} parent=1 // pred_fallthru
      _
    // Predicated region
    $region58: #{_cpw_forward_jit.1} parent=1 // pred_check
      _
    $region59: #{_cpw_forward_jit.1} parent=1 // pred_check_branch
      %95 = sbr.rel (0) target = $region61
    $region60: #{_cpw_forward_jit.1} parent=1 // pred_region
      %97 = vsyncadd [#allocation8], 0
      %s98 = sshll.u32 %s14, 4
      %s99 = int_to_ptr.hbm [resolvable:$true] %s98
      %s100 = sshll.u32 [#allocation7], 4
      %s101 = int_to_ptr.vmem [resolvable:$true] %s100
      %106 = dma.hbm_to_vmem [thread:$0]  %s99, 8192, %s101, [#allocation8], 256, 256, 16
    $region61: #{_cpw_forward_jit.1} parent=1 // pred_fallthru
      _
    // Predicated region
    $region62: #{_cpw_forward_jit.1} parent=1 // pred_check
      _
    $region63: #{_cpw_forward_jit.1} parent=1 // pred_check_branch
      %108 = sbr.rel (0) target = $region65
    $region64: #{_cpw_forward_jit.1} parent=1 // pred_region
      _
    $region65: #{_cpw_forward_jit.1} parent=1 // pred_fallthru
      _
    // Predicated region
    $region66: #{_cpw_forward_jit.1} parent=1 // pred_check
      _
    $region67: #{_cpw_forward_jit.1} parent=1 // pred_check_branch
      %110 = sbr.rel (0) target = $region69
    $region68: #{_cpw_forward_jit.1} parent=1 // pred_region
      _
    $region69: #{_cpw_forward_jit.1} parent=1 // pred_fallthru
      _
    // Predicated region
    $region70: #{_cpw_forward_jit.1} parent=1 // pred_check
      _
    $region71: #{_cpw_forward_jit.1} parent=1 // pred_check_branch
      %112 = sbr.rel (0) target = $region73
    $region72: #{_cpw_forward_jit.1} parent=1 // pred_region
      %114 = vsyncadd [#allocation8], 0
      %s115 = sshll.u32 %s17, 4
      %s116 = int_to_ptr.hbm [resolvable:$true] %s115
      %s117 = sshll.u32 [#allocation9], 4
      %s118 = int_to_ptr.vmem [resolvable:$true] %s117
      %123 = dma.hbm_to_vmem [thread:$0]  %s116, 8192, %s118, [#allocation8], 256, 256, 16
    $region73: #{_cpw_forward_jit.1} parent=1 // pred_fallthru
      _
    // Predicated region
    $region74: #{_cpw_forward_jit.1} parent=1 // pred_check
      _
    $region75: #{_cpw_forward_jit.1} parent=1 // pred_check_branch
      %125 = sbr.rel (0) target = $region77
    $region76: #{_cpw_forward_jit.1} parent=1 // pred_region
      _
    $region77: #{_cpw_forward_jit.1} parent=1 // pred_fallthru
      _
    // Predicated region
    $region78: #{_cpw_forward_jit.1} parent=1 // pred_check
      _
    $region79: #{_cpw_forward_jit.1} parent=1 // pred_check_branch
      %127 = sbr.rel (0) target = $region81
    $region80: #{_cpw_forward_jit.1} parent=1 // pred_region
      %129 = vsyncadd [#allocation11], 0
      %s130 = sshll.u32 %s19, 4
      %s131 = int_to_ptr.hbm [resolvable:$true] %s130
      %s132 = sshll.u32 [#allocation10], 4
      %s133 = int_to_ptr.vmem [resolvable:$true] %s132
      %138 = dma.hbm_to_vmem [thread:$0]  %s131, 8192, %s133, [#allocation11], 256, 256, 16
    $region81: #{_cpw_forward_jit.1} parent=1 // pred_fallthru
      _
    // Predicated region
    $region82: #{_cpw_forward_jit.1} parent=1 // pred_check
      _
    $region83: #{_cpw_forward_jit.1} parent=1 // pred_check_branch
      %140 = sbr.rel (0) target = $region85
    $region84: #{_cpw_forward_jit.1} parent=1 // pred_region
      _
    $region85: #{_cpw_forward_jit.1} parent=1 // pred_fallthru
      _
    // Predicated region
    $region86: #{_cpw_forward_jit.1} parent=1 // pred_check
      _
    $region87: #{_cpw_forward_jit.1} parent=1 // pred_check_branch
      %142 = sbr.rel (0) target = $region89
    $region88: #{_cpw_forward_jit.1} parent=1 // pred_region
      _
    $region89: #{_cpw_forward_jit.1} parent=1 // pred_fallthru
      _
    // Predicated region
    $region90: #{_cpw_forward_jit.1} parent=1 // pred_check
      _
    $region91: #{_cpw_forward_jit.1} parent=1 // pred_check_branch
      %144 = sbr.rel (0) target = $region93
    $region92: #{_cpw_forward_jit.1} parent=1 // pred_region
      _
    $region93: #{_cpw_forward_jit.1} parent=1 // pred_fallthru
      _
    // Predicated region
    $region94: #{_cpw_forward_jit.1} parent=1 // pred_check
      _
    $region95: #{_cpw_forward_jit.1} parent=1 // pred_check_branch
      %146 = sbr.rel (0) target = $region97
    $region96: #{_cpw_forward_jit.1} parent=1 // pred_region
      _
    $region97: #{_cpw_forward_jit.1} parent=1 // pred_fallthru
      _
    // Predicated region
    $region98: #{_cpw_forward_jit.1} parent=1 // pred_check
      _
    $region99: #{_cpw_forward_jit.1} parent=1 // pred_check_branch
      %148 = sbr.rel (0) target = $region101
    $region100: #{_cpw_forward_jit.1} parent=1 // pred_region
      %150 = dma.done [#allocation3], 8192
    $region101: #{_cpw_forward_jit.1} parent=1 // pred_fallthru
      _
    // Predicated region
    $region102: #{_cpw_forward_jit.1} parent=1 // pred_check
      _
    $region103: #{_cpw_forward_jit.1} parent=1 // pred_check_branch
      %152 = sbr.rel (0) target = $region105
    $region104: #{_cpw_forward_jit.1} parent=1 // pred_region
      %154 = dma.done [#allocation5], 8192
    $region105: #{_cpw_forward_jit.1} parent=1 // pred_fallthru
      _
    // Predicated region
    $region106: #{_cpw_forward_jit.1} parent=1 // pred_check
      _
    $region107: #{_cpw_forward_jit.1} parent=1 // pred_check_branch
      %156 = sbr.rel (0) target = $region109
    $region108: #{_cpw_forward_jit.1} parent=1 // pred_region
      %158 = dma.done [#allocation5], 8192
    $region109: #{_cpw_forward_jit.1} parent=1 // pred_fallthru
      _
    // Predicated region
    $region110: #{_cpw_forward_jit.1} parent=1 // pred_check
      _
    $region111: #{_cpw_forward_jit.1} parent=1 // pred_check_branch
      %160 = sbr.rel (0) target = $region113
    $region112: #{_cpw_forward_jit.1} parent=1 // pred_region
      %162 = dma.done [#allocation8], 8192
    $region113: #{_cpw_forward_jit.1} parent=1 // pred_fallthru
      _
    // Predicated region
    $region114: #{_cpw_forward_jit.1} parent=1 // pred_check
      _
    $region115: #{_cpw_forward_jit.1} parent=1 // pred_check_branch
      %164 = sbr.rel (0) target = $region117
    $region116: #{_cpw_forward_jit.1} parent=1 // pred_region
      %166 = dma.done [#allocation8], 8192
    $region117: #{_cpw_forward_jit.1} parent=1 // pred_fallthru
      _
    // Predicated region
    $region118: #{_cpw_forward_jit.1} parent=1 // pred_check
      _
    $region119: #{_cpw_forward_jit.1} parent=1 // pred_check_branch
      %168 = sbr.rel (0) target = $region121
    $region120: #{_cpw_forward_jit.1} parent=1 // pred_region
      %170 = dma.done [#allocation11], 8192
    $region121: #{_cpw_forward_jit.1} parent=1 // pred_fallthru
      _
    %v171 = vld [vmem:[%s0] sm:$0x3]
    %v172 = vld [vmem:[%s1] sm:$0xff]
    %v173 = vld [vmem:[%s2] sm:$0x1]
    %v175 = vperm.slane %v173, 0
    %vm177 = vcmask 64512
    %v179 = vsel %vm177, %v171, 0
    %181 = vmatpush.msra.mxu0 0.0
    %182 = vmatpush.msra.mxu0 0.0
    %183 = vmatpush.msra.mxu0 0.0
    %184 = vmatpush.msra.mxu0 0.0
    %185 = vmatpush.msra.mxu0 0.0
    %186 = vmatpush.msra.mxu0 0.0
    %187 = vmatpush.msra.mxu0 0.0
    %188 = vmatpush.msra.mxu0 0.0
    %189 = vmatpush.msra.mxu0 0.0
    %190 = vmatpush.msra.mxu0 0.0
    %191 = vmatpush.msra.mxu0 0.0
    %192 = vmatpush.msra.mxu0 0.0
    %193 = vmatpush.msra.mxu0 0.0
    %194 = vmatpush.msra.mxu0 0.0
    %195 = vmatpush.msra.mxu0 0.0
    %196 = vmatpush.msra.mxu0 %v172
    %197 = vmatmul.f32.gmra.mxu0 %v179
    %v198 = vpop.f32.mrf.mxu0
    %v199 = vadd.f32 %v175, %v198
    %200 = vdwg.mxu0
    %vm201 = vcmask 254976
    %v202 = vsel %vm201, %v199, 0.0
    %v203 = vrot.slane %v202, 4
    %v204 = vadd.f32 %v202, %v203
    %v205 = vrot.slane %v204, 2
    %v206 = vadd.f32 %v204, %v205
    %v207 = vrot.slane %v206, 1
    %v208 = vadd.f32 %v206, %v207
    %v209 = vmul.f32 %v208, 0.5
    %v210 = vmul.f32 %v199, %v199
    %v211 = vsel %vm201, %v210, 0.0
    %v212 = vrot.slane %v211, 4
    %v213 = vadd.f32 %v211, %v212
    %v214 = vrot.slane %v213, 2
    %v215 = vadd.f32 %v213, %v214
    %v216 = vrot.slane %v215, 1
    %v217 = vadd.f32 %v215, %v216
    %v218 = vmul.f32 %v217, 0.5
    %v219 = vmul.f32 %v209, %v209
    %v220 = vsub.f32 %v218, %v219
    %v221 = vmax.f32 %v220, 0.0
    %v222 = vsub.f32 %v199, %v209
    %v223 = vadd.f32 %v221, 1e-05
    %v224 = vrsqrt.pop %v223
    %v225 = vmul.f32 %v224, %v223
    %v226 = vmul.f32 %v225, %v224
    %v227 = vmul.f32 0.5, %v226
    %v228 = vsub.f32 1.5, %v227
    %v229 = vmul.f32 %v224, %v228
    %vm230 = vweird.f32 %v223
    %vm231 = vweird.f32 %v224
    %vm232 = vmor %vm230, %vm231
    %v233 = vsel %vm232, %v224, %v229
    %v234 = vmul.f32 %v222, %v233
    %v235 = vld [vmem:[%s3] sm:$0x1]
    %v237 = vperm.slane %v235, 0
    %v239 = vmul.f32 %v234, %v237
    %v240 = vld [vmem:[%s4] sm:$0x1]
    %v242 = vperm.slane %v240, 0
    %v244 = vadd.f32 %v239, %v242
    %v245 = vmul.f32 %v244, 0.2
    %v246 = vmax.f32 %v244, %v245
    %v247 = vld [vmem:[%s5] sm:$0xff]
    %v248 = vld [vmem:[%s5 + $0x8] sm:$0xff]
    %v249 = vld [vmem:[%s5 + $0x10] sm:$0xff]
    %v250 = vld [vmem:[%s5 + $0x18] sm:$0xff]
    %v251 = vld [vmem:[%s5 + $0x20] sm:$0xff]
    %v252 = vld [vmem:[%s5 + $0x28] sm:$0xff]
    %v253 = vld [vmem:[%s5 + $0x30] sm:$0xff]
    %v254 = vld [vmem:[%s5 + $0x38] sm:$0xff]
    %v255 = vld [vmem:[%s6] sm:$0x3]
    %v257 = vperm.slane %v255, 0
    %v258 = vperm.slane %v255, 1
    %vm261 = vcmask 261120
    %v263 = vsel %vm261, %v246, 0
    %265 = vmatpush.msra.mxu0 0.0
    %266 = vmatpush.msra.mxu0 0.0
    %267 = vmatpush.msra.mxu0 0.0
    %268 = vmatpush.msra.mxu0 0.0
    %269 = vmatpush.msra.mxu0 0.0
    %270 = vmatpush.msra.mxu0 0.0
    %271 = vmatpush.msra.mxu0 0.0
    %272 = vmatpush.msra.mxu0 0.0
    %273 = vmatpush.msra.mxu0 0.0
    %274 = vmatpush.msra.mxu0 0.0
    %275 = vmatpush.msra.mxu0 0.0
    %276 = vmatpush.msra.mxu0 0.0
    %277 = vmatpush.msra.mxu0 %v253
    %278 = vmatpush.msra.mxu0 %v251
    %279 = vmatpush.msra.mxu0 %v249
    %280 = vmatpush.msra.mxu0 %v247
    %281 = vmatmul.f32.gmra.mxu0 %v263
    %v282 = vpop.f32.mrf.mxu0
    %v283 = vadd.f32 %v257, %v282
    %284 = vdwg.mxu0
    %285 = vmatpush.msra.mxu0 0.0
    %286 = vmatpush.msra.mxu0 0.0
    %287 = vmatpush.msra.mxu0 0.0
    %288 = vmatpush.msra.mxu0 0.0
    %289 = vmatpush.msra.mxu0 0.0
    %290 = vmatpush.msra.mxu0 0.0
    %291 = vmatpush.msra.mxu0 0.0
    %292 = vmatpush.msra.mxu0 0.0
    %293 = vmatpush.msra.mxu0 0.0
    %294 = vmatpush.msra.mxu0 0.0
    %295 = vmatpush.msra.mxu0 0.0
    %296 = vmatpush.msra.mxu0 0.0
    %297 = vmatpush.msra.mxu0 %v254
    %298 = vmatpush.msra.mxu0 %v252
    %299 = vmatpush.msra.mxu0 %v250
    %300 = vmatpush.msra.mxu0 %v248
    %301 = vmatmul.f32.gmra.mxu0 %v263
    %v302 = vpop.f32.mrf.mxu0
    %v303 = vadd.f32 %v258, %v302
    %304 = vdwg.mxu0
    %v305 = vld [vmem:[#allocation2] sm:$0xff]
    %v306 = vld [vmem:[#allocation2 + $0x8] sm:$0xff]
    %v307 = vld [vmem:[#allocation2 + $0x10] sm:$0xff]
    %v308 = vld [vmem:[#allocation2 + $0x18] sm:$0xff]
    %v309 = vld [vmem:[#allocation2 + $0x20] sm:$0xff]
    %v310 = vld [vmem:[#allocation2 + $0x28] sm:$0xff]
    %v311 = vld [vmem:[#allocation2 + $0x30] sm:$0xff]
    %v312 = vld [vmem:[#allocation2 + $0x38] sm:$0xff]
    %v313 = vld [vmem:[#allocation2 + $0x40] sm:$0xff]
    %v314 = vld [vmem:[#allocation2 + $0x48] sm:$0xff]
    %v315 = vld [vmem:[#allocation2 + $0x50] sm:$0xff]
    %v316 = vld [vmem:[#allocation2 + $0x58] sm:$0xff]
    %v317 = vld [vmem:[#allocation2 + $0x60] sm:$0xff]
    %v318 = vld [vmem:[#allocation2 + $0x68] sm:$0xff]
    %v319 = vld [vmem:[#allocation2 + $0x70] sm:$0xff]
    %v320 = vld [vmem:[#allocation2 + $0x78] sm:$0xff]
    %v321 = vld [vmem:[#allocation2 + $0x80] sm:$0xff]
    %v322 = vld [vmem:[#allocation2 + $0x88] sm:$0xff]
    %v323 = vld [vmem:[#allocation2 + $0x90] sm:$0xff]
    %v324 = vld [vmem:[#allocation2 + $0x98] sm:$0xff]
    %v325 = vld [vmem:[#allocation2 + $0xa0] sm:$0xff]
    %v326 = vld [vmem:[#allocation2 + $0xa8] sm:$0xff]
    %v327 = vld [vmem:[#allocation2 + $0xb0] sm:$0xff]
    %v328 = vld [vmem:[#allocation2 + $0xb8] sm:$0xff]
    %v329 = vld [vmem:[#allocation2 + $0xc0] sm:$0xff]
    %v330 = vld [vmem:[#allocation2 + $0xc8] sm:$0xff]
    %v331 = vld [vmem:[#allocation2 + $0xd0] sm:$0xff]
    %v332 = vld [vmem:[#allocation2 + $0xd8] sm:$0xff]
    %v333 = vld [vmem:[#allocation2 + $0xe0] sm:$0xff]
    %v334 = vld [vmem:[#allocation2 + $0xe8] sm:$0xff]
    %v335 = vld [vmem:[#allocation2 + $0xf0] sm:$0xff]
    %v336 = vld [vmem:[#allocation2 + $0xf8] sm:$0xff]
    %v337 = vld [vmem:[#allocation2 + $0x100] sm:$0xff]
    %v338 = vld [vmem:[#allocation2 + $0x108] sm:$0xff]
    %v339 = vld [vmem:[#allocation2 + $0x110] sm:$0xff]
    %v340 = vld [vmem:[#allocation2 + $0x118] sm:$0xff]
    %v341 = vld [vmem:[#allocation2 + $0x120] sm:$0xff]
    %v342 = vld [vmem:[#allocation2 + $0x128] sm:$0xff]
    %v343 = vld [vmem:[#allocation2 + $0x130] sm:$0xff]
    %v344 = vld [vmem:[#allocation2 + $0x138] sm:$0xff]
    %v345 = vld [vmem:[#allocation2 + $0x140] sm:$0xff]
    %v346 = vld [vmem:[#allocation2 + $0x148] sm:$0xff]
    %v347 = vld [vmem:[#allocation2 + $0x150] sm:$0xff]
    %v348 = vld [vmem:[#allocation2 + $0x158] sm:$0xff]
    %v349 = vld [vmem:[#allocation2 + $0x160] sm:$0xff]
    %v350 = vld [vmem:[#allocation2 + $0x168] sm:$0xff]
    %v351 = vld [vmem:[#allocation2 + $0x170] sm:$0xff]
    %v352 = vld [vmem:[#allocation2 + $0x178] sm:$0xff]
    %v353 = vld [vmem:[#allocation2 + $0x180] sm:$0xff]
    %v354 = vld [vmem:[#allocation2 + $0x188] sm:$0xff]
    %v355 = vld [vmem:[#allocation2 + $0x190] sm:$0xff]
    %v356 = vld [vmem:[#allocation2 + $0x198] sm:$0xff]
    %v357 = vld [vmem:[#allocation2 + $0x1a0] sm:$0xff]
    %v358 = vld [vmem:[#allocation2 + $0x1a8] sm:$0xff]
    %v359 = vld [vmem:[#allocation2 + $0x1b0] sm:$0xff]
    %v360 = vld [vmem:[#allocation2 + $0x1b8] sm:$0xff]
    %v361 = vld [vmem:[#allocation2 + $0x1c0] sm:$0xff]
    %v362 = vld [vmem:[#allocation2 + $0x1c8] sm:$0xff]
    %v363 = vld [vmem:[#allocation2 + $0x1d0] sm:$0xff]
    %v364 = vld [vmem:[#allocation2 + $0x1d8] sm:$0xff]
    %v365 = vld [vmem:[#allocation2 + $0x1e0] sm:$0xff]
    %v366 = vld [vmem:[#allocation2 + $0x1e8] sm:$0xff]
    %v367 = vld [vmem:[#allocation2 + $0x1f0] sm:$0xff]
    %v368 = vld [vmem:[#allocation2 + $0x1f8] sm:$0xff]
    %v369 = vld [vmem:[%s8] sm:$0x3]
    %v371 = vperm.slane %v369, 0
    %v372 = vperm.slane %v369, 1
    %375 = vmatpush.msra.mxu0 %v335
    %376 = vmatpush.msra.mxu0 %v333
    %377 = vmatpush.msra.mxu0 %v331
    %378 = vmatpush.msra.mxu0 %v329
    %379 = vmatpush.msra.mxu0 %v327
    %380 = vmatpush.msra.mxu0 %v325
    %381 = vmatpush.msra.mxu0 %v323
    %382 = vmatpush.msra.mxu0 %v321
    %383 = vmatpush.msra.mxu0 %v319
    %384 = vmatpush.msra.mxu0 %v317
    %385 = vmatpush.msra.mxu0 %v315
    %386 = vmatpush.msra.mxu0 %v313
    %387 = vmatpush.msra.mxu0 %v311
    %388 = vmatpush.msra.mxu0 %v309
    %389 = vmatpush.msra.mxu0 %v307
    %390 = vmatpush.msra.mxu0 %v305
    %391 = vmatmul.f32.gmra.mxu0 %v283
    %v392 = vpop.f32.mrf.mxu0
    %v393 = vadd.f32 %v371, %v392
    %394 = vdwg.mxu0
    %395 = vmatpush.msra.mxu0 %v367
    %396 = vmatpush.msra.mxu0 %v365
    %397 = vmatpush.msra.mxu0 %v363
    %398 = vmatpush.msra.mxu0 %v361
    %399 = vmatpush.msra.mxu0 %v359
    %400 = vmatpush.msra.mxu0 %v357
    %401 = vmatpush.msra.mxu0 %v355
    %402 = vmatpush.msra.mxu0 %v353
    %403 = vmatpush.msra.mxu0 %v351
    %404 = vmatpush.msra.mxu0 %v349
    %405 = vmatpush.msra.mxu0 %v347
    %406 = vmatpush.msra.mxu0 %v345
    %407 = vmatpush.msra.mxu0 %v343
    %408 = vmatpush.msra.mxu0 %v341
    %409 = vmatpush.msra.mxu0 %v339
    %410 = vmatpush.msra.mxu0 %v337
    %411 = vmatmul.f32.gmra.mxu0 %v303
    %v412 = vpop.f32.mrf.mxu0
    %v413 = vadd.f32 %v393, %v412
    %414 = vdwg.mxu0
    %415 = vmatpush.msra.mxu0 %v336
    %416 = vmatpush.msra.mxu0 %v334
    %417 = vmatpush.msra.mxu0 %v332
    %418 = vmatpush.msra.mxu0 %v330
    %419 = vmatpush.msra.mxu0 %v328
    %420 = vmatpush.msra.mxu0 %v326
    %421 = vmatpush.msra.mxu0 %v324
    %422 = vmatpush.msra.mxu0 %v322
    %423 = vmatpush.msra.mxu0 %v320
    %424 = vmatpush.msra.mxu0 %v318
    %425 = vmatpush.msra.mxu0 %v316
    %426 = vmatpush.msra.mxu0 %v314
    %427 = vmatpush.msra.mxu0 %v312
    %428 = vmatpush.msra.mxu0 %v310
    %429 = vmatpush.msra.mxu0 %v308
    %430 = vmatpush.msra.mxu0 %v306
    %431 = vmatmul.f32.gmra.mxu0 %v283
    %v432 = vpop.f32.mrf.mxu0
    %v433 = vadd.f32 %v372, %v432
    %434 = vdwg.mxu0
    %435 = vmatpush.msra.mxu0 %v368
    %436 = vmatpush.msra.mxu0 %v366
    %437 = vmatpush.msra.mxu0 %v364
    %438 = vmatpush.msra.mxu0 %v362
    %439 = vmatpush.msra.mxu0 %v360
    %440 = vmatpush.msra.mxu0 %v358
    %441 = vmatpush.msra.mxu0 %v356
    %442 = vmatpush.msra.mxu0 %v354
    %443 = vmatpush.msra.mxu0 %v352
    %444 = vmatpush.msra.mxu0 %v350
    %445 = vmatpush.msra.mxu0 %v348
    %446 = vmatpush.msra.mxu0 %v346
    %447 = vmatpush.msra.mxu0 %v344
    %448 = vmatpush.msra.mxu0 %v342
    %449 = vmatpush.msra.mxu0 %v340
    %450 = vmatpush.msra.mxu0 %v338
    %451 = vmatmul.f32.gmra.mxu0 %v303
    %v452 = vpop.f32.mrf.mxu0
    %v453 = vadd.f32 %v433, %v452
    %454 = vdwg.mxu0
    %vm455 = vcmask 1041408
    %v456 = vsel %vm455, %v413, 0.0
    %v457 = vrot.slane %v456, 4
    %v458 = vadd.f32 %v456, %v457
    %v459 = vrot.slane %v458, 2
    %v460 = vadd.f32 %v458, %v459
    %v461 = vrot.slane %v460, 1
    %v462 = vadd.f32 %v460, %v461
    %v463 = vsel %vm455, %v453, 0.0
    %v464 = vrot.slane %v463, 4
    %v465 = vadd.f32 %v463, %v464
    %v466 = vrot.slane %v465, 2
    %v467 = vadd.f32 %v465, %v466
    %v468 = vrot.slane %v467, 1
    %v469 = vadd.f32 %v467, %v468
    %v470 = vmul.f32 %v413, %v413
    %v471 = vmul.f32 %v453, %v453
    %v472 = vsel %vm455, %v470, 0.0
    %v473 = vrot.slane %v472, 4
    %v474 = vadd.f32 %v472, %v473
    %v475 = vrot.slane %v474, 2
    %v476 = vadd.f32 %v474, %v475
    %v477 = vrot.slane %v476, 1
    %v478 = vadd.f32 %v476, %v477
    %v479 = vsel %vm455, %v471, 0.0
    %v480 = vrot.slane %v479, 4
    %v481 = vadd.f32 %v479, %v480
    %v482 = vrot.slane %v481, 2
    %v483 = vadd.f32 %v481, %v482
    %v484 = vrot.slane %v483, 1
    %v485 = vadd.f32 %v483, %v484
    %vm486 = vcmask 1040384
    %v487 = vsel %vm486, %v462, %v478
    %v488 = vsel %vm486, %v469, %v485
    %v489 = vld [vmem:[#allocation4] sm:$0xff]
    %v490 = vld [vmem:[#allocation4 + $0x8] sm:$0xff]
    %v491 = vld [vmem:[#allocation4 + $0x10] sm:$0xff]
    %v492 = vld [vmem:[#allocation4 + $0x18] sm:$0xff]
    %v493 = vld [vmem:[#allocation4 + $0x20] sm:$0xff]
    %v494 = vld [vmem:[#allocation4 + $0x28] sm:$0xff]
    %v495 = vld [vmem:[#allocation4 + $0x30] sm:$0xff]
    %v496 = vld [vmem:[#allocation4 + $0x38] sm:$0xff]
    %v497 = vld [vmem:[#allocation4 + $0x40] sm:$0xff]
    %v498 = vld [vmem:[#allocation4 + $0x48] sm:$0xff]
    %v499 = vld [vmem:[#allocation4 + $0x50] sm:$0xff]
    %v500 = vld [vmem:[#allocation4 + $0x58] sm:$0xff]
    %v501 = vld [vmem:[#allocation4 + $0x60] sm:$0xff]
    %v502 = vld [vmem:[#allocation4 + $0x68] sm:$0xff]
    %v503 = vld [vmem:[#allocation4 + $0x70] sm:$0xff]
    %v504 = vld [vmem:[#allocation4 + $0x78] sm:$0xff]
    %v505 = vld [vmem:[#allocation4 + $0x80] sm:$0xff]
    %v506 = vld [vmem:[#allocation4 + $0x88] sm:$0xff]
    %v507 = vld [vmem:[#allocation4 + $0x90] sm:$0xff]
    %v508 = vld [vmem:[#allocation4 + $0x98] sm:$0xff]
    %v509 = vld [vmem:[#allocation4 + $0xa0] sm:$0xff]
    %v510 = vld [vmem:[#allocation4 + $0xa8] sm:$0xff]
    %v511 = vld [vmem:[#allocation4 + $0xb0] sm:$0xff]
    %v512 = vld [vmem:[#allocation4 + $0xb8] sm:$0xff]
    %v513 = vld [vmem:[#allocation4 + $0xc0] sm:$0xff]
    %v514 = vld [vmem:[#allocation4 + $0xc8] sm:$0xff]
    %v515 = vld [vmem:[#allocation4 + $0xd0] sm:$0xff]
    %v516 = vld [vmem:[#allocation4 + $0xd8] sm:$0xff]
    %v517 = vld [vmem:[#allocation4 + $0xe0] sm:$0xff]
    %v518 = vld [vmem:[#allocation4 + $0xe8] sm:$0xff]
    %v519 = vld [vmem:[#allocation4 + $0xf0] sm:$0xff]
    %v520 = vld [vmem:[#allocation4 + $0xf8] sm:$0xff]
    %v521 = vld [vmem:[#allocation4 + $0x100] sm:$0xff]
    %v522 = vld [vmem:[#allocation4 + $0x108] sm:$0xff]
    %v523 = vld [vmem:[#allocation4 + $0x110] sm:$0xff]
    %v524 = vld [vmem:[#allocation4 + $0x118] sm:$0xff]
    %v525 = vld [vmem:[#allocation4 + $0x120] sm:$0xff]
    %v526 = vld [vmem:[#allocation4 + $0x128] sm:$0xff]
    %v527 = vld [vmem:[#allocation4 + $0x130] sm:$0xff]
    %v528 = vld [vmem:[#allocation4 + $0x138] sm:$0xff]
    %v529 = vld [vmem:[#allocation4 + $0x140] sm:$0xff]
    %v530 = vld [vmem:[#allocation4 + $0x148] sm:$0xff]
    %v531 = vld [vmem:[#allocation4 + $0x150] sm:$0xff]
    %v532 = vld [vmem:[#allocation4 + $0x158] sm:$0xff]
    %v533 = vld [vmem:[#allocation4 + $0x160] sm:$0xff]
    %v534 = vld [vmem:[#allocation4 + $0x168] sm:$0xff]
    %v535 = vld [vmem:[#allocation4 + $0x170] sm:$0xff]
    %v536 = vld [vmem:[#allocation4 + $0x178] sm:$0xff]
    %v537 = vld [vmem:[#allocation4 + $0x180] sm:$0xff]
    %v538 = vld [vmem:[#allocation4 + $0x188] sm:$0xff]
    %v539 = vld [vmem:[#allocation4 + $0x190] sm:$0xff]
    %v540 = vld [vmem:[#allocation4 + $0x198] sm:$0xff]
    %v541 = vld [vmem:[#allocation4 + $0x1a0] sm:$0xff]
    %v542 = vld [vmem:[#allocation4 + $0x1a8] sm:$0xff]
    %v543 = vld [vmem:[#allocation4 + $0x1b0] sm:$0xff]
    %v544 = vld [vmem:[#allocation4 + $0x1b8] sm:$0xff]
    %v545 = vld [vmem:[#allocation4 + $0x1c0] sm:$0xff]
    %v546 = vld [vmem:[#allocation4 + $0x1c8] sm:$0xff]
    %v547 = vld [vmem:[#allocation4 + $0x1d0] sm:$0xff]
    %v548 = vld [vmem:[#allocation4 + $0x1d8] sm:$0xff]
    %v549 = vld [vmem:[#allocation4 + $0x1e0] sm:$0xff]
    %v550 = vld [vmem:[#allocation4 + $0x1e8] sm:$0xff]
    %v551 = vld [vmem:[#allocation4 + $0x1f0] sm:$0xff]
    %v552 = vld [vmem:[#allocation4 + $0x1f8] sm:$0xff]
    %553 = vmatpush.msra.mxu0 %v519
    %554 = vmatpush.msra.mxu0 %v517
    %555 = vmatpush.msra.mxu0 %v515
    %556 = vmatpush.msra.mxu0 %v513
    %557 = vmatpush.msra.mxu0 %v511
    %558 = vmatpush.msra.mxu0 %v509
    %559 = vmatpush.msra.mxu0 %v507
    %560 = vmatpush.msra.mxu0 %v505
    %561 = vmatpush.msra.mxu0 %v503
    %562 = vmatpush.msra.mxu0 %v501
    %563 = vmatpush.msra.mxu0 %v499
    %564 = vmatpush.msra.mxu0 %v497
    %565 = vmatpush.msra.mxu0 %v495
    %566 = vmatpush.msra.mxu0 %v493
    %567 = vmatpush.msra.mxu0 %v491
    %568 = vmatpush.msra.mxu0 %v489
    %569 = vmatmul.f32.gmra.mxu0 %v487
    %v570 = vpop.f32.mrf.mxu0
    %v571 = vadd.f32 0.0, %v570
    %572 = vdwg.mxu0
    %573 = vmatpush.msra.mxu0 %v551
    %574 = vmatpush.msra.mxu0 %v549
    %575 = vmatpush.msra.mxu0 %v547
    %576 = vmatpush.msra.mxu0 %v545
    %577 = vmatpush.msra.mxu0 %v543
    %578 = vmatpush.msra.mxu0 %v541
    %579 = vmatpush.msra.mxu0 %v539
    %580 = vmatpush.msra.mxu0 %v537
    %581 = vmatpush.msra.mxu0 %v535
    %582 = vmatpush.msra.mxu0 %v533
    %583 = vmatpush.msra.mxu0 %v531
    %584 = vmatpush.msra.mxu0 %v529
    %585 = vmatpush.msra.mxu0 %v527
    %586 = vmatpush.msra.mxu0 %v525
    %587 = vmatpush.msra.mxu0 %v523
    %588 = vmatpush.msra.mxu0 %v521
    %589 = vmatmul.f32.gmra.mxu0 %v488
    %v590 = vpop.f32.mrf.mxu0
    %v591 = vadd.f32 %v571, %v590
    %592 = vdwg.mxu0
    %593 = vmatpush.msra.mxu0 %v520
    %594 = vmatpush.msra.mxu0 %v518
    %595 = vmatpush.msra.mxu0 %v516
    %596 = vmatpush.msra.mxu0 %v514
    %597 = vmatpush.msra.mxu0 %v512
    %598 = vmatpush.msra.mxu0 %v510
    %599 = vmatpush.msra.mxu0 %v508
    %600 = vmatpush.msra.mxu0 %v506
    %601 = vmatpush.msra.mxu0 %v504
    %602 = vmatpush.msra.mxu0 %v502
    %603 = vmatpush.msra.mxu0 %v500
    %604 = vmatpush.msra.mxu0 %v498
    %605 = vmatpush.msra.mxu0 %v496
    %606 = vmatpush.msra.mxu0 %v494
    %607 = vmatpush.msra.mxu0 %v492
    %608 = vmatpush.msra.mxu0 %v490
    %609 = vmatmul.f32.gmra.mxu0 %v487
    %v610 = vpop.f32.mrf.mxu0
    %v611 = vadd.f32 0.0, %v610
    %612 = vdwg.mxu0
    %613 = vmatpush.msra.mxu0 %v552
    %614 = vmatpush.msra.mxu0 %v550
    %615 = vmatpush.msra.mxu0 %v548
    %616 = vmatpush.msra.mxu0 %v546
    %617 = vmatpush.msra.mxu0 %v544
    %618 = vmatpush.msra.mxu0 %v542
    %619 = vmatpush.msra.mxu0 %v540
    %620 = vmatpush.msra.mxu0 %v538
    %621 = vmatpush.msra.mxu0 %v536
    %622 = vmatpush.msra.mxu0 %v534
    %623 = vmatpush.msra.mxu0 %v532
    %624 = vmatpush.msra.mxu0 %v530
    %625 = vmatpush.msra.mxu0 %v528
    %626 = vmatpush.msra.mxu0 %v526
    %627 = vmatpush.msra.mxu0 %v524
    %628 = vmatpush.msra.mxu0 %v522
    %629 = vmatmul.f32.gmra.mxu0 %v488
    %v630 = vpop.f32.mrf.mxu0
    %v631 = vadd.f32 %v611, %v630
    %632 = vdwg.mxu0
    %v633 = vmul.f32 %v591, 0.5
    %v634 = vmul.f32 %v631, 0.5
    %v635 = vmul.f32 %v633, %v633
    %v636 = vmul.f32 %v634, %v634
    %v639 = vrot.slane %v635, 7
    %v640 = vrot.slane %v636, 7
    %v643 = vsub.f32 %v633, %v639
    %v644 = vsub.f32 %v634, %v640
    %v645 = vmax.f32 %v643, 0.0
    %v646 = vmax.f32 %v644, 0.0
    %v647 = vperm.slane %v633, 0
    %v648 = vperm.slane %v634, 0
    %v649 = vsub.f32 %v413, %v647
    %v650 = vsub.f32 %v453, %v648
    %v651 = vadd.f32 %v645, 1e-05
    %v652 = vadd.f32 %v646, 1e-05
    %v653 = vrsqrt.pop %v651
    %v654 = vmul.f32 %v653, %v651
    %v655 = vmul.f32 %v654, %v653
    %v656 = vmul.f32 0.5, %v655
    %v657 = vsub.f32 1.5, %v656
    %v658 = vmul.f32 %v653, %v657
    %vm659 = vweird.f32 %v651
    %vm660 = vweird.f32 %v653
    %vm661 = vmor %vm659, %vm660
    %v662 = vsel %vm661, %v653, %v658
    %v663 = vrsqrt.pop %v652
    %v664 = vmul.f32 %v663, %v652
    %v665 = vmul.f32 %v664, %v663
    %v666 = vmul.f32 0.5, %v665
    %v667 = vsub.f32 1.5, %v666
    %v668 = vmul.f32 %v663, %v667
    %vm669 = vweird.f32 %v652
    %vm670 = vweird.f32 %v663
    %vm671 = vmor %vm669, %vm670
    %v672 = vsel %vm671, %v663, %v668
    %v673 = vperm.slane %v662, 1
    %v674 = vperm.slane %v672, 1
    %v675 = vmul.f32 %v649, %v673
    %v676 = vmul.f32 %v650, %v674
    %v677 = vld [vmem:[%s10] sm:$0x3]
    %v679 = vperm.slane %v677, 0
    %v680 = vperm.slane %v677, 1
    %v683 = vmul.f32 %v675, %v679
    %v684 = vmul.f32 %v676, %v680
    %v685 = vld [vmem:[%s11] sm:$0x3]
    %v687 = vperm.slane %v685, 0
    %v688 = vperm.slane %v685, 1
    %v691 = vadd.f32 %v683, %v687
    %v692 = vadd.f32 %v684, %v688
    %v693 = vmul.f32 %v691, 0.2
    %v694 = vmul.f32 %v692, 0.2
    %v695 = vmax.f32 %v691, %v693
    %v696 = vmax.f32 %v692, %v694
    %v697 = vld [vmem:[#allocation6] sm:$0xff]
    %v698 = vld [vmem:[#allocation6 + $0x8] sm:$0xff]
    %v699 = vld [vmem:[#allocation6 + $0x10] sm:$0xff]
    %v700 = vld [vmem:[#allocation6 + $0x18] sm:$0xff]
    %v701 = vld [vmem:[#allocation6 + $0x20] sm:$0xff]
    %v702 = vld [vmem:[#allocation6 + $0x28] sm:$0xff]
    %v703 = vld [vmem:[#allocation6 + $0x30] sm:$0xff]
    %v704 = vld [vmem:[#allocation6 + $0x38] sm:$0xff]
    %v705 = vld [vmem:[#allocation6 + $0x40] sm:$0xff]
    %v706 = vld [vmem:[#allocation6 + $0x48] sm:$0xff]
    %v707 = vld [vmem:[#allocation6 + $0x50] sm:$0xff]
    %v708 = vld [vmem:[#allocation6 + $0x58] sm:$0xff]
    %v709 = vld [vmem:[#allocation6 + $0x60] sm:$0xff]
    %v710 = vld [vmem:[#allocation6 + $0x68] sm:$0xff]
    %v711 = vld [vmem:[#allocation6 + $0x70] sm:$0xff]
    %v712 = vld [vmem:[#allocation6 + $0x78] sm:$0xff]
    %v713 = vld [vmem:[#allocation6 + $0x80] sm:$0xff]
    %v714 = vld [vmem:[#allocation6 + $0x88] sm:$0xff]
    %v715 = vld [vmem:[#allocation6 + $0x90] sm:$0xff]
    %v716 = vld [vmem:[#allocation6 + $0x98] sm:$0xff]
    %v717 = vld [vmem:[#allocation6 + $0xa0] sm:$0xff]
    %v718 = vld [vmem:[#allocation6 + $0xa8] sm:$0xff]
    %v719 = vld [vmem:[#allocation6 + $0xb0] sm:$0xff]
    %v720 = vld [vmem:[#allocation6 + $0xb8] sm:$0xff]
    %v721 = vld [vmem:[#allocation6 + $0xc0] sm:$0xff]
    %v722 = vld [vmem:[#allocation6 + $0xc8] sm:$0xff]
    %v723 = vld [vmem:[#allocation6 + $0xd0] sm:$0xff]
    %v724 = vld [vmem:[#allocation6 + $0xd8] sm:$0xff]
    %v725 = vld [vmem:[#allocation6 + $0xe0] sm:$0xff]
    %v726 = vld [vmem:[#allocation6 + $0xe8] sm:$0xff]
    %v727 = vld [vmem:[#allocation6 + $0xf0] sm:$0xff]
    %v728 = vld [vmem:[#allocation6 + $0xf8] sm:$0xff]
    %v729 = vld [vmem:[#allocation6 + $0x100] sm:$0xff]
    %v730 = vld [vmem:[#allocation6 + $0x108] sm:$0xff]
    %v731 = vld [vmem:[#allocation6 + $0x110] sm:$0xff]
    %v732 = vld [vmem:[#allocation6 + $0x118] sm:$0xff]
    %v733 = vld [vmem:[#allocation6 + $0x120] sm:$0xff]
    %v734 = vld [vmem:[#allocation6 + $0x128] sm:$0xff]
    %v735 = vld [vmem:[#allocation6 + $0x130] sm:$0xff]
    %v736 = vld [vmem:[#allocation6 + $0x138] sm:$0xff]
    %v737 = vld [vmem:[#allocation6 + $0x140] sm:$0xff]
    %v738 = vld [vmem:[#allocation6 + $0x148] sm:$0xff]
    %v739 = vld [vmem:[#allocation6 + $0x150] sm:$0xff]
    %v740 = vld [vmem:[#allocation6 + $0x158] sm:$0xff]
    %v741 = vld [vmem:[#allocation6 + $0x160] sm:$0xff]
    %v742 = vld [vmem:[#allocation6 + $0x168] sm:$0xff]
    %v743 = vld [vmem:[#allocation6 + $0x170] sm:$0xff]
    %v744 = vld [vmem:[#allocation6 + $0x178] sm:$0xff]
    %v745 = vld [vmem:[#allocation6 + $0x180] sm:$0xff]
    %v746 = vld [vmem:[#allocation6 + $0x188] sm:$0xff]
    %v747 = vld [vmem:[#allocation6 + $0x190] sm:$0xff]
    %v748 = vld [vmem:[#allocation6 + $0x198] sm:$0xff]
    %v749 = vld [vmem:[#allocation6 + $0x1a0] sm:$0xff]
    %v750 = vld [vmem:[#allocation6 + $0x1a8] sm:$0xff]
    %v751 = vld [vmem:[#allocation6 + $0x1b0] sm:$0xff]
    %v752 = vld [vmem:[#allocation6 + $0x1b8] sm:$0xff]
    %v753 = vld [vmem:[#allocation6 + $0x1c0] sm:$0xff]
    %v754 = vld [vmem:[#allocation6 + $0x1c8] sm:$0xff]
    %v755 = vld [vmem:[#allocation6 + $0x1d0] sm:$0xff]
    %v756 = vld [vmem:[#allocation6 + $0x1d8] sm:$0xff]
    %v757 = vld [vmem:[#allocation6 + $0x1e0] sm:$0xff]
    %v758 = vld [vmem:[#allocation6 + $0x1e8] sm:$0xff]
    %v759 = vld [vmem:[#allocation6 + $0x1f0] sm:$0xff]
    %v760 = vld [vmem:[#allocation6 + $0x1f8] sm:$0xff]
    %v761 = vld [vmem:[%s13] sm:$0x3]
    %v763 = vperm.slane %v761, 0
    %v764 = vperm.slane %v761, 1
    %767 = vmatpush.msra.mxu0 %v727
    %768 = vmatpush.msra.mxu0 %v725
    %769 = vmatpush.msra.mxu0 %v723
    %770 = vmatpush.msra.mxu0 %v721
    %771 = vmatpush.msra.mxu0 %v719
    %772 = vmatpush.msra.mxu0 %v717
    %773 = vmatpush.msra.mxu0 %v715
    %774 = vmatpush.msra.mxu0 %v713
    %775 = vmatpush.msra.mxu0 %v711
    %776 = vmatpush.msra.mxu0 %v709
    %777 = vmatpush.msra.mxu0 %v707
    %778 = vmatpush.msra.mxu0 %v705
    %779 = vmatpush.msra.mxu0 %v703
    %780 = vmatpush.msra.mxu0 %v701
    %781 = vmatpush.msra.mxu0 %v699
    %782 = vmatpush.msra.mxu0 %v697
    %783 = vmatmul.f32.gmra.mxu0 %v695
    %v784 = vpop.f32.mrf.mxu0
    %v785 = vadd.f32 %v763, %v784
    %786 = vdwg.mxu0
    %787 = vmatpush.msra.mxu0 %v759
    %788 = vmatpush.msra.mxu0 %v757
    %789 = vmatpush.msra.mxu0 %v755
    %790 = vmatpush.msra.mxu0 %v753
    %791 = vmatpush.msra.mxu0 %v751
    %792 = vmatpush.msra.mxu0 %v749
    %793 = vmatpush.msra.mxu0 %v747
    %794 = vmatpush.msra.mxu0 %v745
    %795 = vmatpush.msra.mxu0 %v743
    %796 = vmatpush.msra.mxu0 %v741
    %797 = vmatpush.msra.mxu0 %v739
    %798 = vmatpush.msra.mxu0 %v737
    %799 = vmatpush.msra.mxu0 %v735
    %800 = vmatpush.msra.mxu0 %v733
    %801 = vmatpush.msra.mxu0 %v731
    %802 = vmatpush.msra.mxu0 %v729
    %803 = vmatmul.f32.gmra.mxu0 %v696
    %v804 = vpop.f32.mrf.mxu0
    %v805 = vadd.f32 %v785, %v804
    %806 = vdwg.mxu0
    %807 = vmatpush.msra.mxu0 %v728
    %808 = vmatpush.msra.mxu0 %v726
    %809 = vmatpush.msra.mxu0 %v724
    %810 = vmatpush.msra.mxu0 %v722
    %811 = vmatpush.msra.mxu0 %v720
    %812 = vmatpush.msra.mxu0 %v718
    %813 = vmatpush.msra.mxu0 %v716
    %814 = vmatpush.msra.mxu0 %v714
    %815 = vmatpush.msra.mxu0 %v712
    %816 = vmatpush.msra.mxu0 %v710
    %817 = vmatpush.msra.mxu0 %v708
    %818 = vmatpush.msra.mxu0 %v706
    %819 = vmatpush.msra.mxu0 %v704
    %820 = vmatpush.msra.mxu0 %v702
    %821 = vmatpush.msra.mxu0 %v700
    %822 = vmatpush.msra.mxu0 %v698
    %823 = vmatmul.f32.gmra.mxu0 %v695
    %v824 = vpop.f32.mrf.mxu0
    %v825 = vadd.f32 %v764, %v824
    %826 = vdwg.mxu0
    %827 = vmatpush.msra.mxu0 %v760
    %828 = vmatpush.msra.mxu0 %v758
    %829 = vmatpush.msra.mxu0 %v756
    %830 = vmatpush.msra.mxu0 %v754
    %831 = vmatpush.msra.mxu0 %v752
    %832 = vmatpush.msra.mxu0 %v750
    %833 = vmatpush.msra.mxu0 %v748
    %834 = vmatpush.msra.mxu0 %v746
    %835 = vmatpush.msra.mxu0 %v744
    %836 = vmatpush.msra.mxu0 %v742
    %837 = vmatpush.msra.mxu0 %v740
    %838 = vmatpush.msra.mxu0 %v738
    %839 = vmatpush.msra.mxu0 %v736
    %840 = vmatpush.msra.mxu0 %v734
    %841 = vmatpush.msra.mxu0 %v732
    %842 = vmatpush.msra.mxu0 %v730
    %843 = vmatmul.f32.gmra.mxu0 %v696
    %v844 = vpop.f32.mrf.mxu0
    %v845 = vadd.f32 %v825, %v844
    %846 = vdwg.mxu0
    %v847 = vsel %vm455, %v805, 0.0
    %v848 = vrot.slane %v847, 4
    %v849 = vadd.f32 %v847, %v848
    %v850 = vrot.slane %v849, 2
    %v851 = vadd.f32 %v849, %v850
    %v852 = vrot.slane %v851, 1
    %v853 = vadd.f32 %v851, %v852
    %v854 = vsel %vm455, %v845, 0.0
    %v855 = vrot.slane %v854, 4
    %v856 = vadd.f32 %v854, %v855
    %v857 = vrot.slane %v856, 2
    %v858 = vadd.f32 %v856, %v857
    %v859 = vrot.slane %v858, 1
    %v860 = vadd.f32 %v858, %v859
    %v861 = vmul.f32 %v805, %v805
    %v862 = vmul.f32 %v845, %v845
    %v863 = vsel %vm455, %v861, 0.0
    %v864 = vrot.slane %v863, 4
    %v865 = vadd.f32 %v863, %v864
    %v866 = vrot.slane %v865, 2
    %v867 = vadd.f32 %v865, %v866
    %v868 = vrot.slane %v867, 1
    %v869 = vadd.f32 %v867, %v868
    %v870 = vsel %vm455, %v862, 0.0
    %v871 = vrot.slane %v870, 4
    %v872 = vadd.f32 %v870, %v871
    %v873 = vrot.slane %v872, 2
    %v874 = vadd.f32 %v872, %v873
    %v875 = vrot.slane %v874, 1
    %v876 = vadd.f32 %v874, %v875
    %v877 = vsel %vm486, %v853, %v869
    %v878 = vsel %vm486, %v860, %v876
    %v879 = vld [vmem:[#allocation7] sm:$0xff]
    %v880 = vld [vmem:[#allocation7 + $0x8] sm:$0xff]
    %v881 = vld [vmem:[#allocation7 + $0x10] sm:$0xff]
    %v882 = vld [vmem:[#allocation7 + $0x18] sm:$0xff]
    %v883 = vld [vmem:[#allocation7 + $0x20] sm:$0xff]
    %v884 = vld [vmem:[#allocation7 + $0x28] sm:$0xff]
    %v885 = vld [vmem:[#allocation7 + $0x30] sm:$0xff]
    %v886 = vld [vmem:[#allocation7 + $0x38] sm:$0xff]
    %v887 = vld [vmem:[#allocation7 + $0x40] sm:$0xff]
    %v888 = vld [vmem:[#allocation7 + $0x48] sm:$0xff]
    %v889 = vld [vmem:[#allocation7 + $0x50] sm:$0xff]
    %v890 = vld [vmem:[#allocation7 + $0x58] sm:$0xff]
    %v891 = vld [vmem:[#allocation7 + $0x60] sm:$0xff]
    %v892 = vld [vmem:[#allocation7 + $0x68] sm:$0xff]
    %v893 = vld [vmem:[#allocation7 + $0x70] sm:$0xff]
    %v894 = vld [vmem:[#allocation7 + $0x78] sm:$0xff]
    %v895 = vld [vmem:[#allocation7 + $0x80] sm:$0xff]
    %v896 = vld [vmem:[#allocation7 + $0x88] sm:$0xff]
    %v897 = vld [vmem:[#allocation7 + $0x90] sm:$0xff]
    %v898 = vld [vmem:[#allocation7 + $0x98] sm:$0xff]
    %v899 = vld [vmem:[#allocation7 + $0xa0] sm:$0xff]
    %v900 = vld [vmem:[#allocation7 + $0xa8] sm:$0xff]
    %v901 = vld [vmem:[#allocation7 + $0xb0] sm:$0xff]
    %v902 = vld [vmem:[#allocation7 + $0xb8] sm:$0xff]
    %v903 = vld [vmem:[#allocation7 + $0xc0] sm:$0xff]
    %v904 = vld [vmem:[#allocation7 + $0xc8] sm:$0xff]
    %v905 = vld [vmem:[#allocation7 + $0xd0] sm:$0xff]
    %v906 = vld [vmem:[#allocation7 + $0xd8] sm:$0xff]
    %v907 = vld [vmem:[#allocation7 + $0xe0] sm:$0xff]
    %v908 = vld [vmem:[#allocation7 + $0xe8] sm:$0xff]
    %v909 = vld [vmem:[#allocation7 + $0xf0] sm:$0xff]
    %v910 = vld [vmem:[#allocation7 + $0xf8] sm:$0xff]
    %v911 = vld [vmem:[#allocation7 + $0x100] sm:$0xff]
    %v912 = vld [vmem:[#allocation7 + $0x108] sm:$0xff]
    %v913 = vld [vmem:[#allocation7 + $0x110] sm:$0xff]
    %v914 = vld [vmem:[#allocation7 + $0x118] sm:$0xff]
    %v915 = vld [vmem:[#allocation7 + $0x120] sm:$0xff]
    %v916 = vld [vmem:[#allocation7 + $0x128] sm:$0xff]
    %v917 = vld [vmem:[#allocation7 + $0x130] sm:$0xff]
    %v918 = vld [vmem:[#allocation7 + $0x138] sm:$0xff]
    %v919 = vld [vmem:[#allocation7 + $0x140] sm:$0xff]
    %v920 = vld [vmem:[#allocation7 + $0x148] sm:$0xff]
    %v921 = vld [vmem:[#allocation7 + $0x150] sm:$0xff]
    %v922 = vld [vmem:[#allocation7 + $0x158] sm:$0xff]
    %v923 = vld [vmem:[#allocation7 + $0x160] sm:$0xff]
    %v924 = vld [vmem:[#allocation7 + $0x168] sm:$0xff]
    %v925 = vld [vmem:[#allocation7 + $0x170] sm:$0xff]
    %v926 = vld [vmem:[#allocation7 + $0x178] sm:$0xff]
    %v927 = vld [vmem:[#allocation7 + $0x180] sm:$0xff]
    %v928 = vld [vmem:[#allocation7 + $0x188] sm:$0xff]
    %v929 = vld [vmem:[#allocation7 + $0x190] sm:$0xff]
    %v930 = vld [vmem:[#allocation7 + $0x198] sm:$0xff]
    %v931 = vld [vmem:[#allocation7 + $0x1a0] sm:$0xff]
    %v932 = vld [vmem:[#allocation7 + $0x1a8] sm:$0xff]
    %v933 = vld [vmem:[#allocation7 + $0x1b0] sm:$0xff]
    %v934 = vld [vmem:[#allocation7 + $0x1b8] sm:$0xff]
    %v935 = vld [vmem:[#allocation7 + $0x1c0] sm:$0xff]
    %v936 = vld [vmem:[#allocation7 + $0x1c8] sm:$0xff]
    %v937 = vld [vmem:[#allocation7 + $0x1d0] sm:$0xff]
    %v938 = vld [vmem:[#allocation7 + $0x1d8] sm:$0xff]
    %v939 = vld [vmem:[#allocation7 + $0x1e0] sm:$0xff]
    %v940 = vld [vmem:[#allocation7 + $0x1e8] sm:$0xff]
    %v941 = vld [vmem:[#allocation7 + $0x1f0] sm:$0xff]
    %v942 = vld [vmem:[#allocation7 + $0x1f8] sm:$0xff]
    %943 = vmatpush.msra.mxu0 %v909
    %944 = vmatpush.msra.mxu0 %v907
    %945 = vmatpush.msra.mxu0 %v905
    %946 = vmatpush.msra.mxu0 %v903
    %947 = vmatpush.msra.mxu0 %v901
    %948 = vmatpush.msra.mxu0 %v899
    %949 = vmatpush.msra.mxu0 %v897
    %950 = vmatpush.msra.mxu0 %v895
    %951 = vmatpush.msra.mxu0 %v893
    %952 = vmatpush.msra.mxu0 %v891
    %953 = vmatpush.msra.mxu0 %v889
    %954 = vmatpush.msra.mxu0 %v887
    %955 = vmatpush.msra.mxu0 %v885
    %956 = vmatpush.msra.mxu0 %v883
    %957 = vmatpush.msra.mxu0 %v881
    %958 = vmatpush.msra.mxu0 %v879
    %959 = vmatmul.f32.gmra.mxu0 %v877
    %v960 = vpop.f32.mrf.mxu0
    %v961 = vadd.f32 0.0, %v960
    %962 = vdwg.mxu0
    %963 = vmatpush.msra.mxu0 %v941
    %964 = vmatpush.msra.mxu0 %v939
    %965 = vmatpush.msra.mxu0 %v937
    %966 = vmatpush.msra.mxu0 %v935
    %967 = vmatpush.msra.mxu0 %v933
    %968 = vmatpush.msra.mxu0 %v931
    %969 = vmatpush.msra.mxu0 %v929
    %970 = vmatpush.msra.mxu0 %v927
    %971 = vmatpush.msra.mxu0 %v925
    %972 = vmatpush.msra.mxu0 %v923
    %973 = vmatpush.msra.mxu0 %v921
    %974 = vmatpush.msra.mxu0 %v919
    %975 = vmatpush.msra.mxu0 %v917
    %976 = vmatpush.msra.mxu0 %v915
    %977 = vmatpush.msra.mxu0 %v913
    %978 = vmatpush.msra.mxu0 %v911
    %979 = vmatmul.f32.gmra.mxu0 %v878
    %v980 = vpop.f32.mrf.mxu0
    %v981 = vadd.f32 %v961, %v980
    %982 = vdwg.mxu0
    %983 = vmatpush.msra.mxu0 %v910
    %984 = vmatpush.msra.mxu0 %v908
    %985 = vmatpush.msra.mxu0 %v906
    %986 = vmatpush.msra.mxu0 %v904
    %987 = vmatpush.msra.mxu0 %v902
    %988 = vmatpush.msra.mxu0 %v900
    %989 = vmatpush.msra.mxu0 %v898
    %990 = vmatpush.msra.mxu0 %v896
    %991 = vmatpush.msra.mxu0 %v894
    %992 = vmatpush.msra.mxu0 %v892
    %993 = vmatpush.msra.mxu0 %v890
    %994 = vmatpush.msra.mxu0 %v888
    %995 = vmatpush.msra.mxu0 %v886
    %996 = vmatpush.msra.mxu0 %v884
    %997 = vmatpush.msra.mxu0 %v882
    %998 = vmatpush.msra.mxu0 %v880
    %999 = vmatmul.f32.gmra.mxu0 %v877
    %v1000 = vpop.f32.mrf.mxu0
    %v1001 = vadd.f32 0.0, %v1000
    %1002 = vdwg.mxu0
    %1003 = vmatpush.msra.mxu0 %v942
    %1004 = vmatpush.msra.mxu0 %v940
    %1005 = vmatpush.msra.mxu0 %v938
    %1006 = vmatpush.msra.mxu0 %v936
    %1007 = vmatpush.msra.mxu0 %v934
    %1008 = vmatpush.msra.mxu0 %v932
    %1009 = vmatpush.msra.mxu0 %v930
    %1010 = vmatpush.msra.mxu0 %v928
    %1011 = vmatpush.msra.mxu0 %v926
    %1012 = vmatpush.msra.mxu0 %v924
    %1013 = vmatpush.msra.mxu0 %v922
    %1014 = vmatpush.msra.mxu0 %v920
    %1015 = vmatpush.msra.mxu0 %v918
    %1016 = vmatpush.msra.mxu0 %v916
    %1017 = vmatpush.msra.mxu0 %v914
    %1018 = vmatpush.msra.mxu0 %v912
    %1019 = vmatmul.f32.gmra.mxu0 %v878
    %v1020 = vpop.f32.mrf.mxu0
    %v1021 = vadd.f32 %v1001, %v1020
    %1022 = vdwg.mxu0
    %v1023 = vmul.f32 %v981, 0.5
    %v1024 = vmul.f32 %v1021, 0.5
    %v1025 = vmul.f32 %v1023, %v1023
    %v1026 = vmul.f32 %v1024, %v1024
    %v1029 = vrot.slane %v1025, 7
    %v1030 = vrot.slane %v1026, 7
    %v1033 = vsub.f32 %v1023, %v1029
    %v1034 = vsub.f32 %v1024, %v1030
    %v1035 = vmax.f32 %v1033, 0.0
    %v1036 = vmax.f32 %v1034, 0.0
    %v1037 = vperm.slane %v1023, 0
    %v1038 = vperm.slane %v1024, 0
    %v1039 = vsub.f32 %v805, %v1037
    %v1040 = vsub.f32 %v845, %v1038
    %v1041 = vadd.f32 %v1035, 1e-05
    %v1042 = vadd.f32 %v1036, 1e-05
    %v1043 = vrsqrt.pop %v1041
    %v1044 = vmul.f32 %v1043, %v1041
    %v1045 = vmul.f32 %v1044, %v1043
    %v1046 = vmul.f32 0.5, %v1045
    %v1047 = vsub.f32 1.5, %v1046
    %v1048 = vmul.f32 %v1043, %v1047
    %vm1049 = vweird.f32 %v1041
    %vm1050 = vweird.f32 %v1043
    %vm1051 = vmor %vm1049, %vm1050
    %v1052 = vsel %vm1051, %v1043, %v1048
    %v1053 = vrsqrt.pop %v1042
    %v1054 = vmul.f32 %v1053, %v1042
    %v1055 = vmul.f32 %v1054, %v1053
    %v1056 = vmul.f32 0.5, %v1055
    %v1057 = vsub.f32 1.5, %v1056
    %v1058 = vmul.f32 %v1053, %v1057
    %vm1059 = vweird.f32 %v1042
    %vm1060 = vweird.f32 %v1053
    %vm1061 = vmor %vm1059, %vm1060
    %v1062 = vsel %vm1061, %v1053, %v1058
    %v1063 = vperm.slane %v1052, 1
    %v1064 = vperm.slane %v1062, 1
    %v1065 = vmul.f32 %v1039, %v1063
    %v1066 = vmul.f32 %v1040, %v1064
    %v1067 = vld [vmem:[%s15] sm:$0x3]
    %v1069 = vperm.slane %v1067, 0
    %v1070 = vperm.slane %v1067, 1
    %v1073 = vmul.f32 %v1065, %v1069
    %v1074 = vmul.f32 %v1066, %v1070
    %v1075 = vld [vmem:[%s16] sm:$0x3]
    %v1077 = vperm.slane %v1075, 0
    %v1078 = vperm.slane %v1075, 1
    %v1081 = vadd.f32 %v1073, %v1077
    %v1082 = vadd.f32 %v1074, %v1078
    %v1083 = vmul.f32 %v1081, 0.2
    %v1084 = vmul.f32 %v1082, 0.2
    %v1085 = vmax.f32 %v1081, %v1083
    %v1086 = vmax.f32 %v1082, %v1084
    %v1087 = vld [vmem:[#allocation9] sm:$0xff]
    %v1088 = vld [vmem:[#allocation9 + $0x8] sm:$0xff]
    %v1089 = vld [vmem:[#allocation9 + $0x10] sm:$0xff]
    %v1090 = vld [vmem:[#allocation9 + $0x18] sm:$0xff]
    %v1091 = vld [vmem:[#allocation9 + $0x20] sm:$0xff]
    %v1092 = vld [vmem:[#allocation9 + $0x28] sm:$0xff]
    %v1093 = vld [vmem:[#allocation9 + $0x30] sm:$0xff]
    %v1094 = vld [vmem:[#allocation9 + $0x38] sm:$0xff]
    %v1095 = vld [vmem:[#allocation9 + $0x40] sm:$0xff]
    %v1096 = vld [vmem:[#allocation9 + $0x48] sm:$0xff]
    %v1097 = vld [vmem:[#allocation9 + $0x50] sm:$0xff]
    %v1098 = vld [vmem:[#allocation9 + $0x58] sm:$0xff]
    %v1099 = vld [vmem:[#allocation9 + $0x60] sm:$0xff]
    %v1100 = vld [vmem:[#allocation9 + $0x68] sm:$0xff]
    %v1101 = vld [vmem:[#allocation9 + $0x70] sm:$0xff]
    %v1102 = vld [vmem:[#allocation9 + $0x78] sm:$0xff]
    %v1103 = vld [vmem:[#allocation9 + $0x80] sm:$0xff]
    %v1104 = vld [vmem:[#allocation9 + $0x88] sm:$0xff]
    %v1105 = vld [vmem:[#allocation9 + $0x90] sm:$0xff]
    %v1106 = vld [vmem:[#allocation9 + $0x98] sm:$0xff]
    %v1107 = vld [vmem:[#allocation9 + $0xa0] sm:$0xff]
    %v1108 = vld [vmem:[#allocation9 + $0xa8] sm:$0xff]
    %v1109 = vld [vmem:[#allocation9 + $0xb0] sm:$0xff]
    %v1110 = vld [vmem:[#allocation9 + $0xb8] sm:$0xff]
    %v1111 = vld [vmem:[#allocation9 + $0xc0] sm:$0xff]
    %v1112 = vld [vmem:[#allocation9 + $0xc8] sm:$0xff]
    %v1113 = vld [vmem:[#allocation9 + $0xd0] sm:$0xff]
    %v1114 = vld [vmem:[#allocation9 + $0xd8] sm:$0xff]
    %v1115 = vld [vmem:[#allocation9 + $0xe0] sm:$0xff]
    %v1116 = vld [vmem:[#allocation9 + $0xe8] sm:$0xff]
    %v1117 = vld [vmem:[#allocation9 + $0xf0] sm:$0xff]
    %v1118 = vld [vmem:[#allocation9 + $0xf8] sm:$0xff]
    %v1119 = vld [vmem:[#allocation9 + $0x100] sm:$0xff]
    %v1120 = vld [vmem:[#allocation9 + $0x108] sm:$0xff]
    %v1121 = vld [vmem:[#allocation9 + $0x110] sm:$0xff]
    %v1122 = vld [vmem:[#allocation9 + $0x118] sm:$0xff]
    %v1123 = vld [vmem:[#allocation9 + $0x120] sm:$0xff]
    %v1124 = vld [vmem:[#allocation9 + $0x128] sm:$0xff]
    %v1125 = vld [vmem:[#allocation9 + $0x130] sm:$0xff]
    %v1126 = vld [vmem:[#allocation9 + $0x138] sm:$0xff]
    %v1127 = vld [vmem:[#allocation9 + $0x140] sm:$0xff]
    %v1128 = vld [vmem:[#allocation9 + $0x148] sm:$0xff]
    %v1129 = vld [vmem:[#allocation9 + $0x150] sm:$0xff]
    %v1130 = vld [vmem:[#allocation9 + $0x158] sm:$0xff]
    %v1131 = vld [vmem:[#allocation9 + $0x160] sm:$0xff]
    %v1132 = vld [vmem:[#allocation9 + $0x168] sm:$0xff]
    %v1133 = vld [vmem:[#allocation9 + $0x170] sm:$0xff]
    %v1134 = vld [vmem:[#allocation9 + $0x178] sm:$0xff]
    %v1135 = vld [vmem:[#allocation9 + $0x180] sm:$0xff]
    %v1136 = vld [vmem:[#allocation9 + $0x188] sm:$0xff]
    %v1137 = vld [vmem:[#allocation9 + $0x190] sm:$0xff]
    %v1138 = vld [vmem:[#allocation9 + $0x198] sm:$0xff]
    %v1139 = vld [vmem:[#allocation9 + $0x1a0] sm:$0xff]
    %v1140 = vld [vmem:[#allocation9 + $0x1a8] sm:$0xff]
    %v1141 = vld [vmem:[#allocation9 + $0x1b0] sm:$0xff]
    %v1142 = vld [vmem:[#allocation9 + $0x1b8] sm:$0xff]
    %v1143 = vld [vmem:[#allocation9 + $0x1c0] sm:$0xff]
    %v1144 = vld [vmem:[#allocation9 + $0x1c8] sm:$0xff]
    %v1145 = vld [vmem:[#allocation9 + $0x1d0] sm:$0xff]
    %v1146 = vld [vmem:[#allocation9 + $0x1d8] sm:$0xff]
    %v1147 = vld [vmem:[#allocation9 + $0x1e0] sm:$0xff]
    %v1148 = vld [vmem:[#allocation9 + $0x1e8] sm:$0xff]
    %v1149 = vld [vmem:[#allocation9 + $0x1f0] sm:$0xff]
    %v1150 = vld [vmem:[#allocation9 + $0x1f8] sm:$0xff]
    %v1151 = vld [vmem:[%s18] sm:$0x3]
    %v1153 = vperm.slane %v1151, 0
    %v1154 = vperm.slane %v1151, 1
    %1157 = vmatpush.msra.mxu0 %v1117
    %1158 = vmatpush.msra.mxu0 %v1115
    %1159 = vmatpush.msra.mxu0 %v1113
    %1160 = vmatpush.msra.mxu0 %v1111
    %1161 = vmatpush.msra.mxu0 %v1109
    %1162 = vmatpush.msra.mxu0 %v1107
    %1163 = vmatpush.msra.mxu0 %v1105
    %1164 = vmatpush.msra.mxu0 %v1103
    %1165 = vmatpush.msra.mxu0 %v1101
    %1166 = vmatpush.msra.mxu0 %v1099
    %1167 = vmatpush.msra.mxu0 %v1097
    %1168 = vmatpush.msra.mxu0 %v1095
    %1169 = vmatpush.msra.mxu0 %v1093
    %1170 = vmatpush.msra.mxu0 %v1091
    %1171 = vmatpush.msra.mxu0 %v1089
    %1172 = vmatpush.msra.mxu0 %v1087
    %1173 = vmatmul.f32.gmra.mxu0 %v1085
    %v1174 = vpop.f32.mrf.mxu0
    %v1175 = vadd.f32 %v1153, %v1174
    %1176 = vdwg.mxu0
    %1177 = vmatpush.msra.mxu0 %v1149
    %1178 = vmatpush.msra.mxu0 %v1147
    %1179 = vmatpush.msra.mxu0 %v1145
    %1180 = vmatpush.msra.mxu0 %v1143
    %1181 = vmatpush.msra.mxu0 %v1141
    %1182 = vmatpush.msra.mxu0 %v1139
    %1183 = vmatpush.msra.mxu0 %v1137
    %1184 = vmatpush.msra.mxu0 %v1135
    %1185 = vmatpush.msra.mxu0 %v1133
    %1186 = vmatpush.msra.mxu0 %v1131
    %1187 = vmatpush.msra.mxu0 %v1129
    %1188 = vmatpush.msra.mxu0 %v1127
    %1189 = vmatpush.msra.mxu0 %v1125
    %1190 = vmatpush.msra.mxu0 %v1123
    %1191 = vmatpush.msra.mxu0 %v1121
    %1192 = vmatpush.msra.mxu0 %v1119
    %1193 = vmatmul.f32.gmra.mxu0 %v1086
    %v1194 = vpop.f32.mrf.mxu0
    %v1195 = vadd.f32 %v1175, %v1194
    %1196 = vdwg.mxu0
    %1197 = vmatpush.msra.mxu0 %v1118
    %1198 = vmatpush.msra.mxu0 %v1116
    %1199 = vmatpush.msra.mxu0 %v1114
    %1200 = vmatpush.msra.mxu0 %v1112
    %1201 = vmatpush.msra.mxu0 %v1110
    %1202 = vmatpush.msra.mxu0 %v1108
    %1203 = vmatpush.msra.mxu0 %v1106
    %1204 = vmatpush.msra.mxu0 %v1104
    %1205 = vmatpush.msra.mxu0 %v1102
    %1206 = vmatpush.msra.mxu0 %v1100
    %1207 = vmatpush.msra.mxu0 %v1098
    %1208 = vmatpush.msra.mxu0 %v1096
    %1209 = vmatpush.msra.mxu0 %v1094
    %1210 = vmatpush.msra.mxu0 %v1092
    %1211 = vmatpush.msra.mxu0 %v1090
    %1212 = vmatpush.msra.mxu0 %v1088
    %1213 = vmatmul.f32.gmra.mxu0 %v1085
    %v1214 = vpop.f32.mrf.mxu0
    %v1215 = vadd.f32 %v1154, %v1214
    %1216 = vdwg.mxu0
    %1217 = vmatpush.msra.mxu0 %v1150
    %1218 = vmatpush.msra.mxu0 %v1148
    %1219 = vmatpush.msra.mxu0 %v1146
    %1220 = vmatpush.msra.mxu0 %v1144
    %1221 = vmatpush.msra.mxu0 %v1142
    %1222 = vmatpush.msra.mxu0 %v1140
    %1223 = vmatpush.msra.mxu0 %v1138
    %1224 = vmatpush.msra.mxu0 %v1136
    %1225 = vmatpush.msra.mxu0 %v1134
    %1226 = vmatpush.msra.mxu0 %v1132
    %1227 = vmatpush.msra.mxu0 %v1130
    %1228 = vmatpush.msra.mxu0 %v1128
    %1229 = vmatpush.msra.mxu0 %v1126
    %1230 = vmatpush.msra.mxu0 %v1124
    %1231 = vmatpush.msra.mxu0 %v1122
    %1232 = vmatpush.msra.mxu0 %v1120
    %1233 = vmatmul.f32.gmra.mxu0 %v1086
    %v1234 = vpop.f32.mrf.mxu0
    %v1235 = vadd.f32 %v1215, %v1234
    %1236 = vdwg.mxu0
    %v1237 = vsel %vm455, %v1195, 0.0
    %v1238 = vrot.slane %v1237, 4
    %v1239 = vadd.f32 %v1237, %v1238
    %v1240 = vrot.slane %v1239, 2
    %v1241 = vadd.f32 %v1239, %v1240
    %v1242 = vrot.slane %v1241, 1
    %v1243 = vadd.f32 %v1241, %v1242
    %v1244 = vsel %vm455, %v1235, 0.0
    %v1245 = vrot.slane %v1244, 4
    %v1246 = vadd.f32 %v1244, %v1245
    %v1247 = vrot.slane %v1246, 2
    %v1248 = vadd.f32 %v1246, %v1247
    %v1249 = vrot.slane %v1248, 1
    %v1250 = vadd.f32 %v1248, %v1249
    %v1251 = vmul.f32 %v1195, %v1195
    %v1252 = vmul.f32 %v1235, %v1235
    %v1253 = vsel %vm455, %v1251, 0.0
    %v1254 = vrot.slane %v1253, 4
    %v1255 = vadd.f32 %v1253, %v1254
    %v1256 = vrot.slane %v1255, 2
    %v1257 = vadd.f32 %v1255, %v1256
    %v1258 = vrot.slane %v1257, 1
    %v1259 = vadd.f32 %v1257, %v1258
    %v1260 = vsel %vm455, %v1252, 0.0
    %v1261 = vrot.slane %v1260, 4
    %v1262 = vadd.f32 %v1260, %v1261
    %v1263 = vrot.slane %v1262, 2
    %v1264 = vadd.f32 %v1262, %v1263
    %v1265 = vrot.slane %v1264, 1
    %v1266 = vadd.f32 %v1264, %v1265
    %v1267 = vsel %vm486, %v1243, %v1259
    %v1268 = vsel %vm486, %v1250, %v1266
    %v1269 = vld [vmem:[#allocation10] sm:$0xff]
    %v1270 = vld [vmem:[#allocation10 + $0x8] sm:$0xff]
    %v1271 = vld [vmem:[#allocation10 + $0x10] sm:$0xff]
    %v1272 = vld [vmem:[#allocation10 + $0x18] sm:$0xff]
    %v1273 = vld [vmem:[#allocation10 + $0x20] sm:$0xff]
    %v1274 = vld [vmem:[#allocation10 + $0x28] sm:$0xff]
    %v1275 = vld [vmem:[#allocation10 + $0x30] sm:$0xff]
    %v1276 = vld [vmem:[#allocation10 + $0x38] sm:$0xff]
    %v1277 = vld [vmem:[#allocation10 + $0x40] sm:$0xff]
    %v1278 = vld [vmem:[#allocation10 + $0x48] sm:$0xff]
    %v1279 = vld [vmem:[#allocation10 + $0x50] sm:$0xff]
    %v1280 = vld [vmem:[#allocation10 + $0x58] sm:$0xff]
    %v1281 = vld [vmem:[#allocation10 + $0x60] sm:$0xff]
    %v1282 = vld [vmem:[#allocation10 + $0x68] sm:$0xff]
    %v1283 = vld [vmem:[#allocation10 + $0x70] sm:$0xff]
    %v1284 = vld [vmem:[#allocation10 + $0x78] sm:$0xff]
    %v1285 = vld [vmem:[#allocation10 + $0x80] sm:$0xff]
    %v1286 = vld [vmem:[#allocation10 + $0x88] sm:$0xff]
    %v1287 = vld [vmem:[#allocation10 + $0x90] sm:$0xff]
    %v1288 = vld [vmem:[#allocation10 + $0x98] sm:$0xff]
    %v1289 = vld [vmem:[#allocation10 + $0xa0] sm:$0xff]
    %v1290 = vld [vmem:[#allocation10 + $0xa8] sm:$0xff]
    %v1291 = vld [vmem:[#allocation10 + $0xb0] sm:$0xff]
    %v1292 = vld [vmem:[#allocation10 + $0xb8] sm:$0xff]
    %v1293 = vld [vmem:[#allocation10 + $0xc0] sm:$0xff]
    %v1294 = vld [vmem:[#allocation10 + $0xc8] sm:$0xff]
    %v1295 = vld [vmem:[#allocation10 + $0xd0] sm:$0xff]
    %v1296 = vld [vmem:[#allocation10 + $0xd8] sm:$0xff]
    %v1297 = vld [vmem:[#allocation10 + $0xe0] sm:$0xff]
    %v1298 = vld [vmem:[#allocation10 + $0xe8] sm:$0xff]
    %v1299 = vld [vmem:[#allocation10 + $0xf0] sm:$0xff]
    %v1300 = vld [vmem:[#allocation10 + $0xf8] sm:$0xff]
    %v1301 = vld [vmem:[#allocation10 + $0x100] sm:$0xff]
    %v1302 = vld [vmem:[#allocation10 + $0x108] sm:$0xff]
    %v1303 = vld [vmem:[#allocation10 + $0x110] sm:$0xff]
    %v1304 = vld [vmem:[#allocation10 + $0x118] sm:$0xff]
    %v1305 = vld [vmem:[#allocation10 + $0x120] sm:$0xff]
    %v1306 = vld [vmem:[#allocation10 + $0x128] sm:$0xff]
    %v1307 = vld [vmem:[#allocation10 + $0x130] sm:$0xff]
    %v1308 = vld [vmem:[#allocation10 + $0x138] sm:$0xff]
    %v1309 = vld [vmem:[#allocation10 + $0x140] sm:$0xff]
    %v1310 = vld [vmem:[#allocation10 + $0x148] sm:$0xff]
    %v1311 = vld [vmem:[#allocation10 + $0x150] sm:$0xff]
    %v1312 = vld [vmem:[#allocation10 + $0x158] sm:$0xff]
    %v1313 = vld [vmem:[#allocation10 + $0x160] sm:$0xff]
    %v1314 = vld [vmem:[#allocation10 + $0x168] sm:$0xff]
    %v1315 = vld [vmem:[#allocation10 + $0x170] sm:$0xff]
    %v1316 = vld [vmem:[#allocation10 + $0x178] sm:$0xff]
    %v1317 = vld [vmem:[#allocation10 + $0x180] sm:$0xff]
    %v1318 = vld [vmem:[#allocation10 + $0x188] sm:$0xff]
    %v1319 = vld [vmem:[#allocation10 + $0x190] sm:$0xff]
    %v1320 = vld [vmem:[#allocation10 + $0x198] sm:$0xff]
    %v1321 = vld [vmem:[#allocation10 + $0x1a0] sm:$0xff]
    %v1322 = vld [vmem:[#allocation10 + $0x1a8] sm:$0xff]
    %v1323 = vld [vmem:[#allocation10 + $0x1b0] sm:$0xff]
    %v1324 = vld [vmem:[#allocation10 + $0x1b8] sm:$0xff]
    %v1325 = vld [vmem:[#allocation10 + $0x1c0] sm:$0xff]
    %v1326 = vld [vmem:[#allocation10 + $0x1c8] sm:$0xff]
    %v1327 = vld [vmem:[#allocation10 + $0x1d0] sm:$0xff]
    %v1328 = vld [vmem:[#allocation10 + $0x1d8] sm:$0xff]
    %v1329 = vld [vmem:[#allocation10 + $0x1e0] sm:$0xff]
    %v1330 = vld [vmem:[#allocation10 + $0x1e8] sm:$0xff]
    %v1331 = vld [vmem:[#allocation10 + $0x1f0] sm:$0xff]
    %v1332 = vld [vmem:[#allocation10 + $0x1f8] sm:$0xff]
    %1333 = vmatpush.msra.mxu0 %v1299
    %1334 = vmatpush.msra.mxu0 %v1297
    %1335 = vmatpush.msra.mxu0 %v1295
    %1336 = vmatpush.msra.mxu0 %v1293
    %1337 = vmatpush.msra.mxu0 %v1291
    %1338 = vmatpush.msra.mxu0 %v1289
    %1339 = vmatpush.msra.mxu0 %v1287
    %1340 = vmatpush.msra.mxu0 %v1285
    %1341 = vmatpush.msra.mxu0 %v1283
    %1342 = vmatpush.msra.mxu0 %v1281
    %1343 = vmatpush.msra.mxu0 %v1279
    %1344 = vmatpush.msra.mxu0 %v1277
    %1345 = vmatpush.msra.mxu0 %v1275
    %1346 = vmatpush.msra.mxu0 %v1273
    %1347 = vmatpush.msra.mxu0 %v1271
    %1348 = vmatpush.msra.mxu0 %v1269
    %1349 = vmatmul.f32.gmra.mxu0 %v1267
    %v1350 = vpop.f32.mrf.mxu0
    %v1351 = vadd.f32 0.0, %v1350
    %1352 = vdwg.mxu0
    %1353 = vmatpush.msra.mxu0 %v1331
    %1354 = vmatpush.msra.mxu0 %v1329
    %1355 = vmatpush.msra.mxu0 %v1327
    %1356 = vmatpush.msra.mxu0 %v1325
    %1357 = vmatpush.msra.mxu0 %v1323
    %1358 = vmatpush.msra.mxu0 %v1321
    %1359 = vmatpush.msra.mxu0 %v1319
    %1360 = vmatpush.msra.mxu0 %v1317
    %1361 = vmatpush.msra.mxu0 %v1315
    %1362 = vmatpush.msra.mxu0 %v1313
    %1363 = vmatpush.msra.mxu0 %v1311
    %1364 = vmatpush.msra.mxu0 %v1309
    %1365 = vmatpush.msra.mxu0 %v1307
    %1366 = vmatpush.msra.mxu0 %v1305
    %1367 = vmatpush.msra.mxu0 %v1303
    %1368 = vmatpush.msra.mxu0 %v1301
    %1369 = vmatmul.f32.gmra.mxu0 %v1268
    %v1370 = vpop.f32.mrf.mxu0
    %v1371 = vadd.f32 %v1351, %v1370
    %1372 = vdwg.mxu0
    %1373 = vmatpush.msra.mxu0 %v1300
    %1374 = vmatpush.msra.mxu0 %v1298
    %1375 = vmatpush.msra.mxu0 %v1296
    %1376 = vmatpush.msra.mxu0 %v1294
    %1377 = vmatpush.msra.mxu0 %v1292
    %1378 = vmatpush.msra.mxu0 %v1290
    %1379 = vmatpush.msra.mxu0 %v1288
    %1380 = vmatpush.msra.mxu0 %v1286
    %1381 = vmatpush.msra.mxu0 %v1284
    %1382 = vmatpush.msra.mxu0 %v1282
    %1383 = vmatpush.msra.mxu0 %v1280
    %1384 = vmatpush.msra.mxu0 %v1278
    %1385 = vmatpush.msra.mxu0 %v1276
    %1386 = vmatpush.msra.mxu0 %v1274
    %1387 = vmatpush.msra.mxu0 %v1272
    %1388 = vmatpush.msra.mxu0 %v1270
    %1389 = vmatmul.f32.gmra.mxu0 %v1267
    %v1390 = vpop.f32.mrf.mxu0
    %v1391 = vadd.f32 0.0, %v1390
    %1392 = vdwg.mxu0
    %1393 = vmatpush.msra.mxu0 %v1332
    %1394 = vmatpush.msra.mxu0 %v1330
    %1395 = vmatpush.msra.mxu0 %v1328
    %1396 = vmatpush.msra.mxu0 %v1326
    %1397 = vmatpush.msra.mxu0 %v1324
    %1398 = vmatpush.msra.mxu0 %v1322
    %1399 = vmatpush.msra.mxu0 %v1320
    %1400 = vmatpush.msra.mxu0 %v1318
    %1401 = vmatpush.msra.mxu0 %v1316
    %1402 = vmatpush.msra.mxu0 %v1314
    %1403 = vmatpush.msra.mxu0 %v1312
    %1404 = vmatpush.msra.mxu0 %v1310
    %1405 = vmatpush.msra.mxu0 %v1308
    %1406 = vmatpush.msra.mxu0 %v1306
    %1407 = vmatpush.msra.mxu0 %v1304
    %1408 = vmatpush.msra.mxu0 %v1302
    %1409 = vmatmul.f32.gmra.mxu0 %v1268
    %v1410 = vpop.f32.mrf.mxu0
    %v1411 = vadd.f32 %v1391, %v1410
    %1412 = vdwg.mxu0
    %v1413 = vmul.f32 %v1371, 0.5
    %v1414 = vmul.f32 %v1411, 0.5
    %v1415 = vmul.f32 %v1413, %v1413
    %v1416 = vmul.f32 %v1414, %v1414
    %v1419 = vrot.slane %v1415, 7
    %v1420 = vrot.slane %v1416, 7
    %v1423 = vsub.f32 %v1413, %v1419
    %v1424 = vsub.f32 %v1414, %v1420
    %v1425 = vmax.f32 %v1423, 0.0
    %v1426 = vmax.f32 %v1424, 0.0
    %v1427 = vperm.slane %v1413, 0
    %v1428 = vperm.slane %v1414, 0
    %v1429 = vsub.f32 %v1195, %v1427
    %v1430 = vsub.f32 %v1235, %v1428
    %v1431 = vadd.f32 %v1425, 1e-05
    %v1432 = vadd.f32 %v1426, 1e-05
    %v1433 = vrsqrt.pop %v1431
    %v1434 = vmul.f32 %v1433, %v1431
    %v1435 = vmul.f32 %v1434, %v1433
    %v1436 = vmul.f32 0.5, %v1435
    %v1437 = vsub.f32 1.5, %v1436
    %v1438 = vmul.f32 %v1433, %v1437
    %vm1439 = vweird.f32 %v1431
    %vm1440 = vweird.f32 %v1433
    %vm1441 = vmor %vm1439, %vm1440
    %v1442 = vsel %vm1441, %v1433, %v1438
    %v1443 = vrsqrt.pop %v1432
    %v1444 = vmul.f32 %v1443, %v1432
    %v1445 = vmul.f32 %v1444, %v1443
    %v1446 = vmul.f32 0.5, %v1445
    %v1447 = vsub.f32 1.5, %v1446
    %v1448 = vmul.f32 %v1443, %v1447
    %vm1449 = vweird.f32 %v1432
    %vm1450 = vweird.f32 %v1443
    %vm1451 = vmor %vm1449, %vm1450
    %v1452 = vsel %vm1451, %v1443, %v1448
    %v1453 = vperm.slane %v1442, 1
    %v1454 = vperm.slane %v1452, 1
    %v1455 = vmul.f32 %v1429, %v1453
    %v1456 = vmul.f32 %v1430, %v1454
    %v1457 = vld [vmem:[%s20] sm:$0x3]
    %v1459 = vperm.slane %v1457, 0
    %v1460 = vperm.slane %v1457, 1
    %v1463 = vmul.f32 %v1455, %v1459
    %v1464 = vmul.f32 %v1456, %v1460
    %v1465 = vld [vmem:[%s21] sm:$0x3]
    %v1467 = vperm.slane %v1465, 0
    %v1468 = vperm.slane %v1465, 1
    %v1471 = vadd.f32 %v1463, %v1467
    %v1472 = vadd.f32 %v1464, %v1468
    %v1473 = vmul.f32 %v1471, 0.2
    %v1474 = vmul.f32 %v1472, 0.2
    %v1475 = vmax.f32 %v1471, %v1473
    %v1476 = vmax.f32 %v1472, %v1474
    %v1477 = vld [vmem:[%s22] sm:$0xff]
    %v1478 = vld [vmem:[%s22 + $0x8] sm:$0xff]
    %v1479 = vld [vmem:[%s22 + $0x10] sm:$0xff]
    %v1480 = vld [vmem:[%s22 + $0x18] sm:$0xff]
    %v1481 = vld [vmem:[%s22 + $0x20] sm:$0xff]
    %v1482 = vld [vmem:[%s22 + $0x28] sm:$0xff]
    %v1483 = vld [vmem:[%s22 + $0x30] sm:$0xff]
    %v1484 = vld [vmem:[%s22 + $0x38] sm:$0xff]
    %v1485 = vld [vmem:[%s22 + $0x40] sm:$0xff]
    %v1486 = vld [vmem:[%s22 + $0x48] sm:$0xff]
    %v1487 = vld [vmem:[%s22 + $0x50] sm:$0xff]
    %v1488 = vld [vmem:[%s22 + $0x58] sm:$0xff]
    %v1489 = vld [vmem:[%s22 + $0x60] sm:$0xff]
    %v1490 = vld [vmem:[%s22 + $0x68] sm:$0xff]
    %v1491 = vld [vmem:[%s22 + $0x70] sm:$0xff]
    %v1492 = vld [vmem:[%s22 + $0x78] sm:$0xff]
    %v1493 = vld [vmem:[%s22 + $0x80] sm:$0xff]
    %v1494 = vld [vmem:[%s22 + $0x88] sm:$0xff]
    %v1495 = vld [vmem:[%s22 + $0x90] sm:$0xff]
    %v1496 = vld [vmem:[%s22 + $0x98] sm:$0xff]
    %v1497 = vld [vmem:[%s22 + $0xa0] sm:$0xff]
    %v1498 = vld [vmem:[%s22 + $0xa8] sm:$0xff]
    %v1499 = vld [vmem:[%s22 + $0xb0] sm:$0xff]
    %v1500 = vld [vmem:[%s22 + $0xb8] sm:$0xff]
    %v1501 = vld [vmem:[%s22 + $0xc0] sm:$0xff]
    %v1502 = vld [vmem:[%s22 + $0xc8] sm:$0xff]
    %v1503 = vld [vmem:[%s22 + $0xd0] sm:$0xff]
    %v1504 = vld [vmem:[%s22 + $0xd8] sm:$0xff]
    %v1505 = vld [vmem:[%s22 + $0xe0] sm:$0xff]
    %v1506 = vld [vmem:[%s22 + $0xe8] sm:$0xff]
    %v1507 = vld [vmem:[%s22 + $0xf0] sm:$0xff]
    %v1508 = vld [vmem:[%s22 + $0xf8] sm:$0xff]
    %v1509 = vld [vmem:[%s23] sm:$0x1]
    %v1511 = vperm.slane %v1509, 0
    %1513 = vmatpush.msra.mxu0 %v1492
    %1514 = vmatpush.msra.mxu0 %v1491
    %1515 = vmatpush.msra.mxu0 %v1490
    %1516 = vmatpush.msra.mxu0 %v1489
    %1517 = vmatpush.msra.mxu0 %v1488
    %1518 = vmatpush.msra.mxu0 %v1487
    %1519 = vmatpush.msra.mxu0 %v1486
    %1520 = vmatpush.msra.mxu0 %v1485
    %1521 = vmatpush.msra.mxu0 %v1484
    %1522 = vmatpush.msra.mxu0 %v1483
    %1523 = vmatpush.msra.mxu0 %v1482
    %1524 = vmatpush.msra.mxu0 %v1481
    %1525 = vmatpush.msra.mxu0 %v1480
    %1526 = vmatpush.msra.mxu0 %v1479
    %1527 = vmatpush.msra.mxu0 %v1478
    %1528 = vmatpush.msra.mxu0 %v1477
    %1529 = vmatmul.f32.gmra.mxu0 %v1475
    %v1530 = vpop.f32.mrf.mxu0
    %v1531 = vadd.f32 %v1511, %v1530
    %1532 = vdwg.mxu0
    %1533 = vmatpush.msra.mxu0 %v1508
    %1534 = vmatpush.msra.mxu0 %v1507
    %1535 = vmatpush.msra.mxu0 %v1506
    %1536 = vmatpush.msra.mxu0 %v1505
    %1537 = vmatpush.msra.mxu0 %v1504
    %1538 = vmatpush.msra.mxu0 %v1503
    %1539 = vmatpush.msra.mxu0 %v1502
    %1540 = vmatpush.msra.mxu0 %v1501
    %1541 = vmatpush.msra.mxu0 %v1500
    %1542 = vmatpush.msra.mxu0 %v1499
    %1543 = vmatpush.msra.mxu0 %v1498
    %1544 = vmatpush.msra.mxu0 %v1497
    %1545 = vmatpush.msra.mxu0 %v1496
    %1546 = vmatpush.msra.mxu0 %v1495
    %1547 = vmatpush.msra.mxu0 %v1494
    %1548 = vmatpush.msra.mxu0 %v1493
    %1549 = vmatmul.f32.gmra.mxu0 %v1476
    %v1550 = vpop.f32.mrf.mxu0
    %v1551 = vadd.f32 %v1531, %v1550
    %1552 = vdwg.mxu0
    %v1553 = vlaneseq
    %v1554 = vand.u32 %v1553, 127
    %vm1555 = vcmp.lt.s32.totalorder %v1554, 64
    %v1556 = vtanh.pop %v1551
    %v1557 = vxor.u32 %v1551, 2147483648
    %v1558 = vmul.f32 %v1557, 1.442695
    %v1559 = vpow.pop %v1558
    %v1560 = vadd.f32 %v1559, 1.0
    %v1561 = vrcp.pop %v1560
    %v1562 = vmul.f32 %v1560, %v1561
    %v1563 = vsub.f32 1.0, %v1562
    %v1564 = vmul.f32 %v1561, %v1563
    %v1565 = vadd.f32 %v1561, %v1564
    %vm1566 = vweird.f32 %v1560
    %vm1567 = vweird.f32 %v1561
    %vm1568 = vmor %vm1566, %vm1567
    %v1569 = vsel %vm1568, %v1561, %v1565
    %v1570 = vand.u32 2147483647, %v1560
    %vm1571 = vcmp.eq.f32.partialorder %v1570, 8.507059e+37
    %v1572 = vand.u32 %v1560, 2147483648
    %v1573 = vor.u32 1.1754944e-38, %v1572
    %v1574 = vsel %vm1571, %v1573, %v1569
    %v1575 = vmul.f32 1.0, %v1574
    %v1576 = vsel %vm1555, %v1556, %v1575
    %vm1577 = vcmask 779264
    %1578 = vst.msk [vmem:[%s24] sm:$0x3] %vm1577, %v1576
    // Predicated region
    $region122: #{_cpw_forward_jit.1} parent=1 // pred_check
      _
    $region123: #{_cpw_forward_jit.1} parent=1 // pred_check_branch
      %1580 = sbr.rel (0) target = $region125
    $region124: #{_cpw_forward_jit.1} parent=1 // pred_region
      _
    $region125: #{_cpw_forward_jit.1} parent=1 // pred_fallthru
      _
    // Predicated region
    $region126: #{_cpw_forward_jit.1} parent=1 // pred_check
      _
    $region127: #{_cpw_forward_jit.1} parent=1 // pred_check_branch
      %1582 = sbr.rel (0) target = $region129
    $region128: #{_cpw_forward_jit.1} parent=1 // pred_region
      _
    $region129: #{_cpw_forward_jit.1} parent=1 // pred_fallthru
      _
    %1583 = vsyncpa [#allocation3], 1
    %1584 = vsyncpa [#allocation5], 1
    %1585 = vsyncpa [#allocation8], 1
    %1586 = vsyncpa [#allocation11], 1

</llo_original>
